<compile_context>
chip_gen: v5e
topology: v5e:2x2
jax: 0.10.0
libtpu: 0.0.40
codegen_flags: <defaults>
</compile_context>

<pallas_src>
import functools

import jax
import jax.numpy as jnp
from jax.experimental import pallas as pl
from jax.experimental.pallas import tpu as pltpu


# Row layout of the packed small-parameter operand (one [1, Dp_pk] row each).
PACK_ROWS = ("b1", "s1", "t1", "b2", "s2", "t2", "b3", "s3", "t3",
             "b4", "s4", "t4", "br", "ln_g", "ln_b")
PACK_IDX = {name: i for i, name in enumerate(PACK_ROWS)}


def gcn_model_kernel(a_ref, x_ref, w1_ref, w2_ref, w3_ref, w4_ref, wr_ref, pk_ref,
                     o_ref, *, out_dim, dp_hid, dp_out, conv1_left):
    f32 = jnp.float32
    bf16 = jnp.bfloat16

    a = a_ref[...]        # [Mp, Mp]     bf16 block-diagonal normalized adjacency
    x = x_ref[...]        # [Mp, Dp_in]  bf16 stacked node features (zero padded)
    pk = pk_ref[...]      # [16, Dp_pk]  f32 packed bias / BN / LN vectors

    def prow(name, width):                 # [1, width] broadcastable row
        i = PACK_IDX[name]
        return pk[i:i + 1, :width]         # width is a static multiple of 128

    def gcn_conv(h, w_ref, bias, *, left_first):
        # A_hat @ (H @ W) + b, bf16 MXU inputs, f32 accumulation.
        hb = h.astype(bf16)
        w = w_ref[...]
        if left_first:                     # (A @ H) @ W : MxM contraction on narrow side
            ah = jnp.dot(a, hb, preferred_element_type=f32)
            out = jnp.dot(ah.astype(bf16), w, preferred_element_type=f32)
        else:                              # A @ (H @ W)
            hw = jnp.dot(hb, w, preferred_element_type=f32)
            out = jnp.dot(a, hw.astype(bf16), preferred_element_type=f32)
        return out + bias

    def leaky_relu(h):
        return jnp.where(h > 0, h, 0.01 * h)

    # residual branch: Linear(input_dim, output_dim)
    identity = jnp.dot(x, wr_ref[...], preferred_element_type=f32) + prow("br", dp_out)

    # conv1 -> bn1 -> leaky_relu   (dropout = identity in eval mode)
    h = leaky_relu(gcn_conv(x, w1_ref, prow("b1", dp_hid), left_first=conv1_left)
                   * prow("s1", dp_hid) + prow("t1", dp_hid))
    # TODO(synk): training-mode dropout would need pltpu.prng_* in-kernel.
    # conv2 -> bn2 -> leaky_relu
    h = leaky_relu(gcn_conv(h, w2_ref, prow("b2", dp_hid), left_first=False)
                   * prow("s2", dp_hid) + prow("t2", dp_hid))
    # conv3 -> bn3 -> leaky_relu
    h = leaky_relu(gcn_conv(h, w3_ref, prow("b3", dp_hid), left_first=False)
                   * prow("s3", dp_hid) + prow("t3", dp_hid))
    # conv4, then residual add, then bn4 (folded affine) -- matches torch order.
    h = gcn_conv(h, w4_ref, prow("b4", dp_out), left_first=False)
    h = h + identity
    h = h * prow("s4", dp_out) + prow("t4", dp_out)

    # LayerNorm over the first `out_dim` lanes.
    # INVARIANT: every padded lane of h is exactly zero here (zero-padded W4/Wr
    # columns and zero b4/s4/t4/br pk entries), so full-width sums are already the
    # sums over the real lanes -- no lane mask needed for mean OR variance.
    inv_d = 1.0 / out_dim
    mu = jnp.sum(h, axis=-1, keepdims=True) * inv_d
    var = jnp.sum(h * h, axis=-1, keepdims=True) * inv_d - mu * mu
    h = (h - mu) * jax.lax.rsqrt(var + 1e-5)
    h = h * prow("ln_g", dp_out) + prow("ln_b", dp_out)   # padded gamma/beta are zero

    o_ref[...] = h.astype(o_ref.dtype)


def _round_up(x, m):
    return (x + m - 1) // m * m


def _pad(x, shape):
    return jnp.pad(x, [(0, s - d) for d, s in zip(x.shape, shape)])


def _conv1_left(input_dim, hidden_dim):
    # Keep the Mp x Mp adjacency contraction paired with the narrower feature side.
    return _round_up(input_dim, 128) <= _round_up(hidden_dim, 128)


def gcn_model_forward(a_hat, x, params):
    """a_hat: [B, N, N] f32 normalized adjacency; x: [B, N, input_dim] f32."""
    B, N, _ = a_hat.shape
    input_dim = x.shape[-1]
    hidden_dim = params["w1"].shape[1]
    output_dim = params["w4"].shape[1]

    Np = _round_up(N, 16)             # bf16 packs 2 rows per sublane
    Mp = _round_up(B * Np, 128)       # stacked rows; multiple of 128 -> lane-dense A
    Dp_in = _round_up(input_dim, 128)
    Dp_hid = _round_up(hidden_dim, 128)
    Dp_out = _round_up(output_dim, 128)
    Dp_pk = max(Dp_hid, Dp_out)
    PK = _round_up(len(PACK_ROWS), 8)

    f32, bf16 = jnp.float32, jnp.bfloat16

    # Block-diagonal normalized adjacency + stacked node features (zero padded).
    # The zero padding is what makes the in-kernel LayerNorm shortcuts valid.
    a_blk = jnp.zeros((Mp, Mp), f32)
    x_stk = jnp.zeros((Mp, Dp_in), f32)
    for b in range(B):
        r = b * Np
        a_blk = a_blk.at[r:r + N, r:r + N].set(a_hat[b])
        x_stk = x_stk.at[r:r + N, :input_dim].set(x[b])
    a_blk = a_blk.astype(bf16)
    x_stk = x_stk.astype(bf16)

    # Per-dimension padded weights (padded rows/cols are zero).
    w1p = _pad(params["w1"], (Dp_in, Dp_hid)).astype(bf16)
    w2p = _pad(params["w2"], (Dp_hid, Dp_hid)).astype(bf16)
    w3p = _pad(params["w3"], (Dp_hid, Dp_hid)).astype(bf16)
    w4p = _pad(params["w4"], (Dp_hid, Dp_out)).astype(bf16)
    wrp = _pad(params["wr"], (Dp_in, Dp_out)).astype(bf16)

    # Pack all 15 small vectors into one f32 [PK, Dp_pk] operand (zero padded):
    # one DMA instead of 15 tiny descriptor setups.
    pk = jnp.zeros((PK, Dp_pk), f32)
    for name in PACK_ROWS:
        v = params[name].astype(f32).reshape(-1)
        pk = pk.at[PACK_IDX[name], : v.shape[0]].set(v)

    conv1_left = _conv1_left(input_dim, hidden_dim)

    # Advisory cost estimate for XLA's scheduler (padded matmul dims = real MXU work).
    def mm(m, k, n):
        return 2 * m * k * n
    if conv1_left:
        conv1_flops = mm(Mp, Mp, Dp_in) + mm(Mp, Dp_in, Dp_hid)
    else:
        conv1_flops = mm(Mp, Dp_in, Dp_hid) + mm(Mp, Mp, Dp_hid)
    flops = (conv1_flops
             + 2 * (mm(Mp, Dp_hid, Dp_hid) + mm(Mp, Mp, Dp_hid))   # conv2, conv3
             + mm(Mp, Dp_hid, Dp_out) + mm(Mp, Mp, Dp_out)         # conv4
             + mm(Mp, Dp_in, Dp_out))                              # residual linear
    bytes_accessed = int(2 * (a_blk.size + x_stk.size + w1p.size + w2p.size
                              + w3p.size + w4p.size + wrp.size)
                         + 4 * pk.size + 4 * Mp * Dp_out)
    cost = pl.CostEstimate(flops=flops, transcendentals=Mp,
                           bytes_accessed=bytes_accessed)

    kernel = functools.partial(gcn_model_kernel, out_dim=output_dim,
                               dp_hid=Dp_hid, dp_out=Dp_out, conv1_left=conv1_left)

    # Gridless call: every operand is a single full VMEM block, loaded exactly once
    # (~0.4 MiB total at these shapes -- far under the default scoped-VMEM limit,
    # so no vmem_limit_bytes override is needed).
    out_stk = pl.pallas_call(
        kernel,
        out_shape=jax.ShapeDtypeStruct((Mp, Dp_out), jnp.float32),
        cost_estimate=cost,
    )(a_blk, x_stk, w1p, w2p, w3p, w4p, wrp, pk)

    return out_stk[: B * Np].reshape(B, Np, Dp_out)[:, :N, :output_dim]


def build_normalized_adjacency(edge_index, num_nodes):
    """Dense GCN-normalized adjacency (PyG gcn_norm semantics).

    Duplicate edges sum (scatter-add) and self-loops are only added where
    missing (add_remaining_self_loops)."""
    src, dst = edge_index[0], edge_index[1]
    adj = jnp.zeros((num_nodes, num_nodes), jnp.float32)
    adj = adj.at[dst, src].add(1.0)                          # message flows src -> dst
    diag = jnp.diagonal(adj)
    adj = adj + jnp.diag(jnp.where(diag == 0.0, 1.0, 0.0))   # add remaining self loops
    deg = jnp.sum(adj, axis=1)                               # in-degree incl. self loop
    dis = jnp.where(deg > 0.0, jax.lax.rsqrt(jnp.maximum(deg, 1e-12)), 0.0)
    return adj * dis[:, None] * dis[None, :]


def folded_bn(key, dim):
    """Deterministic BatchNorm1d params folded into 1-D (scale, shift)."""
    k1, k2, k3, k4 = jax.random.split(key, 4)
    gamma = 1.0 + 0.1 * jax.random.normal(k1, (dim,), jnp.float32)
    beta = 0.1 * jax.random.normal(k2, (dim,), jnp.float32)
    r_mean = 0.1 * jax.random.normal(k3, (dim,), jnp.float32)
    r_var = 1.0 + 0.1 * jax.random.uniform(k4, (dim,), jnp.float32)
    scale = gamma * jax.lax.rsqrt(r_var + 1e-5)
    shift = beta - r_mean * scale
    return scale, shift


def init_params(key, input_dim, hidden_dim, output_dim):
    ks = jax.random.split(key, 16)

    def w(k, shape):
        return 0.1 * jax.random.normal(k, shape, jnp.float32)

    p = {}
    p["w1"], p["b1"] = w(ks[0], (input_dim, hidden_dim)), w(ks[1], (hidden_dim,))
    p["w2"], p["b2"] = w(ks[2], (hidden_dim, hidden_dim)), w(ks[3], (hidden_dim,))
    p["w3"], p["b3"] = w(ks[4], (hidden_dim, hidden_dim)), w(ks[5], (hidden_dim,))
    p["w4"], p["b4"] = w(ks[6], (hidden_dim, output_dim)), w(ks[7], (output_dim,))
    p["wr"], p["br"] = w(ks[8], (input_dim, output_dim)), w(ks[9], (output_dim,))
    p["s1"], p["t1"] = folded_bn(ks[10], hidden_dim)
    p["s2"], p["t2"] = folded_bn(ks[11], hidden_dim)
    p["s3"], p["t3"] = folded_bn(ks[12], hidden_dim)
    p["s4"], p["t4"] = folded_bn(ks[13], output_dim)
    p["ln_g"] = 1.0 + 0.1 * jax.random.normal(ks[14], (output_dim,), jnp.float32)
    p["ln_b"] = 0.1 * jax.random.normal(ks[15], (output_dim,), jnp.float32)
    return p


def reference_forward(a, x, p, *, conv1_left):
    """Pure-JAX reference for one graph, mirroring the kernel's bf16/f32 math."""
    bf16, f32 = jnp.bfloat16, jnp.float32
    ab = a.astype(bf16)

    def conv(h, w, b, left_first):
        hb = h.astype(bf16)
        wb = w.astype(bf16)
        if left_first:
            ah = jnp.dot(ab, hb, preferred_element_type=f32)
            out = jnp.dot(ah.astype(bf16), wb, preferred_element_type=f32)
        else:
            hw = jnp.dot(hb, wb, preferred_element_type=f32)
            out = jnp.dot(ab, hw.astype(bf16), preferred_element_type=f32)
        return out + b

    leaky = lambda h: jnp.where(h > 0, h, 0.01 * h)
    identity = jnp.dot(x.astype(bf16), p["wr"].astype(bf16),
                       preferred_element_type=f32) + p["br"]
    h = leaky(conv(x, p["w1"], p["b1"], conv1_left) * p["s1"] + p["t1"])
    h = leaky(conv(h, p["w2"], p["b2"], False) * p["s2"] + p["t2"])
    h = leaky(conv(h, p["w3"], p["b3"], False) * p["s3"] + p["t3"])
    h = conv(h, p["w4"], p["b4"], False) + identity
    h = h * p["s4"] + p["t4"]
    mu = jnp.mean(h, axis=-1, keepdims=True)
    var = jnp.mean((h - mu) ** 2, axis=-1, keepdims=True)
    h = (h - mu) * jax.lax.rsqrt(var + 1e-5)
    return h * p["ln_g"] + p["ln_b"]


def ring_graph(n, chord_stride):
    """Deterministic graph: bidirectional ring + a few directed chords."""
    ring_src = jnp.arange(n)
    ring_dst = (jnp.arange(n) + 1) % n
    chord_src = jnp.arange(0, n, 4)
    chord_dst = (chord_src + chord_stride) % n
    src = jnp.concatenate([ring_src, ring_dst, chord_src])
    dst = jnp.concatenate([ring_dst, ring_src, chord_dst])
    return jnp.stack([src, dst]).astype(jnp.int32)


if __name__ == "__main__":
    B = 4             # number of graphs stacked into the matmul M dimension
    N = 16            # nodes per graph
    INPUT_DIM = 8
    HIDDEN_DIM = 32
    OUTPUT_DIM = 16

    key = jax.random.PRNGKey(0)
    k_x, k_p = jax.random.split(key)

    x_b = jax.random.normal(k_x, (B, N, INPUT_DIM), jnp.float32)
    a_b = jnp.stack([
        build_normalized_adjacency(ring_graph(N, N // 2 + b), N) for b in range(B)
    ])
    params = init_params(k_p, INPUT_DIM, HIDDEN_DIM, OUTPUT_DIM)

    out = gcn_model_forward(a_b, x_b, params)
    out = jax.block_until_ready(out)

    assert out.shape == (B, N, OUTPUT_DIM)
    assert bool(jnp.all(jnp.isfinite(out)))

    conv1_left = _conv1_left(INPUT_DIM, HIDDEN_DIM)
    ref = jnp.stack([
        reference_forward(a_b[b], x_b[b], params, conv1_left=conv1_left)
        for b in range(B)
    ])
    max_err = float(jnp.max(jnp.abs(out - ref)))
    assert max_err < 5e-2, f"kernel vs reference max abs err {max_err}"

    print("KERNEL_OK")
</pallas_src>

<mosaic_0001>
module attributes {stable_mosaic.version = 11 : i64} {
  func.func @gcn_model_kernel(%arg0: memref<128x128xbf16, #tpu.memory_space<vmem>>, %arg1: memref<128x128xbf16, #tpu.memory_space<vmem>>, %arg2: memref<128x128xbf16, #tpu.memory_space<vmem>>, %arg3: memref<128x128xbf16, #tpu.memory_space<vmem>>, %arg4: memref<128x128xbf16, #tpu.memory_space<vmem>>, %arg5: memref<128x128xbf16, #tpu.memory_space<vmem>>, %arg6: memref<128x128xbf16, #tpu.memory_space<vmem>>, %arg7: memref<16x128xf32, #tpu.memory_space<vmem>>, %arg8: memref<128x128xf32, #tpu.memory_space<vmem>>) attributes {dimension_semantics = [], scalar_prefetch = 0 : i64, scratch_operands = 0 : i64, tpu.core_type = #tpu.core_type<tc>} {
    %c0 = arith.constant 0 : index
    %c0_0 = arith.constant 0 : index
    %0 = vector.load %arg0[%c0, %c0_0] : memref<128x128xbf16, #tpu.memory_space<vmem>>, vector<128x128xbf16>
    %c0_1 = arith.constant 0 : index
    %c0_2 = arith.constant 0 : index
    %1 = vector.load %arg1[%c0_1, %c0_2] : memref<128x128xbf16, #tpu.memory_space<vmem>>, vector<128x128xbf16>
    %c0_3 = arith.constant 0 : index
    %c0_4 = arith.constant 0 : index
    %2 = vector.load %arg7[%c0_3, %c0_4] : memref<16x128xf32, #tpu.memory_space<vmem>>, vector<16x128xf32>
    %c0_5 = arith.constant 0 : index
    %c0_6 = arith.constant 0 : index
    %3 = vector.load %arg6[%c0_5, %c0_6] : memref<128x128xbf16, #tpu.memory_space<vmem>>, vector<128x128xbf16>
    %cst = arith.constant dense<0.000000e+00> : vector<128x128xf32>
    %4 = tpu.matmul %1, %3, %cst {dimension_numbers = #tpu.dot_dimension_numbers<[1], [0], [0], [1], [0, 0, 1, 1], [], []>} : vector<128x128xbf16>, vector<128x128xbf16>, vector<128x128xf32> -> vector<128x128xf32>
    %5 = vector.extract_strided_slice %2 {offsets = [12, 0], sizes = [1, 128], strides = [1, 1]} : vector<16x128xf32> to vector<1x128xf32>
    %6 = vector.broadcast %5 : vector<1x128xf32> to vector<128x128xf32>
    %7 = arith.addf %4, %6 : vector<128x128xf32>
    %8 = vector.extract_strided_slice %2 {offsets = [0, 0], sizes = [1, 128], strides = [1, 1]} : vector<16x128xf32> to vector<1x128xf32>
    %c0_7 = arith.constant 0 : index
    %c0_8 = arith.constant 0 : index
    %9 = vector.load %arg2[%c0_7, %c0_8] : memref<128x128xbf16, #tpu.memory_space<vmem>>, vector<128x128xbf16>
    %cst_9 = arith.constant dense<0.000000e+00> : vector<128x128xf32>
    %10 = tpu.matmul %0, %1, %cst_9 {dimension_numbers = #tpu.dot_dimension_numbers<[1], [0], [0], [1], [0, 0, 1, 1], [], []>} : vector<128x128xbf16>, vector<128x128xbf16>, vector<128x128xf32> -> vector<128x128xf32>
    %11 = arith.truncf %10 : vector<128x128xf32> to vector<128x128xbf16>
    %cst_10 = arith.constant dense<0.000000e+00> : vector<128x128xf32>
    %12 = tpu.matmul %11, %9, %cst_10 {dimension_numbers = #tpu.dot_dimension_numbers<[1], [0], [0], [1], [0, 0, 1, 1], [], []>} : vector<128x128xbf16>, vector<128x128xbf16>, vector<128x128xf32> -> vector<128x128xf32>
    %13 = vector.broadcast %8 : vector<1x128xf32> to vector<128x128xf32>
    %14 = arith.addf %12, %13 : vector<128x128xf32>
    %15 = vector.extract_strided_slice %2 {offsets = [1, 0], sizes = [1, 128], strides = [1, 1]} : vector<16x128xf32> to vector<1x128xf32>
    %16 = vector.broadcast %15 : vector<1x128xf32> to vector<128x128xf32>
    %17 = arith.mulf %14, %16 : vector<128x128xf32>
    %18 = vector.extract_strided_slice %2 {offsets = [2, 0], sizes = [1, 128], strides = [1, 1]} : vector<16x128xf32> to vector<1x128xf32>
    %19 = vector.broadcast %18 : vector<1x128xf32> to vector<128x128xf32>
    %20 = arith.addf %17, %19 : vector<128x128xf32>
    %cst_11 = arith.constant 0.000000e+00 : f32
    %21 = vector.broadcast %cst_11 : f32 to vector<128x128xf32>
    %22 = arith.cmpf ogt, %20, %21 : vector<128x128xf32>
    %cst_12 = arith.constant 0.00999999977 : f32
    %23 = vector.broadcast %cst_12 : f32 to vector<128x128xf32>
    %24 = arith.mulf %23, %20 : vector<128x128xf32>
    %25 = arith.select %22, %20, %24 : vector<128x128xi1>, vector<128x128xf32>
    %26 = vector.extract_strided_slice %2 {offsets = [3, 0], sizes = [1, 128], strides = [1, 1]} : vector<16x128xf32> to vector<1x128xf32>
    %27 = arith.truncf %25 : vector<128x128xf32> to vector<128x128xbf16>
    %c0_13 = arith.constant 0 : index
    %c0_14 = arith.constant 0 : index
    %28 = vector.load %arg3[%c0_13, %c0_14] : memref<128x128xbf16, #tpu.memory_space<vmem>>, vector<128x128xbf16>
    %cst_15 = arith.constant dense<0.000000e+00> : vector<128x128xf32>
    %29 = tpu.matmul %27, %28, %cst_15 {dimension_numbers = #tpu.dot_dimension_numbers<[1], [0], [0], [1], [0, 0, 1, 1], [], []>} : vector<128x128xbf16>, vector<128x128xbf16>, vector<128x128xf32> -> vector<128x128xf32>
    %30 = arith.truncf %29 : vector<128x128xf32> to vector<128x128xbf16>
    %cst_16 = arith.constant dense<0.000000e+00> : vector<128x128xf32>
    %31 = tpu.matmul %0, %30, %cst_16 {dimension_numbers = #tpu.dot_dimension_numbers<[1], [0], [0], [1], [0, 0, 1, 1], [], []>} : vector<128x128xbf16>, vector<128x128xbf16>, vector<128x128xf32> -> vector<128x128xf32>
    %32 = vector.broadcast %26 : vector<1x128xf32> to vector<128x128xf32>
    %33 = arith.addf %31, %32 : vector<128x128xf32>
    %34 = vector.extract_strided_slice %2 {offsets = [4, 0], sizes = [1, 128], strides = [1, 1]} : vector<16x128xf32> to vector<1x128xf32>
    %35 = vector.broadcast %34 : vector<1x128xf32> to vector<128x128xf32>
    %36 = arith.mulf %33, %35 : vector<128x128xf32>
    %37 = vector.extract_strided_slice %2 {offsets = [5, 0], sizes = [1, 128], strides = [1, 1]} : vector<16x128xf32> to vector<1x128xf32>
    %38 = vector.broadcast %37 : vector<1x128xf32> to vector<128x128xf32>
    %39 = arith.addf %36, %38 : vector<128x128xf32>
    %cst_17 = arith.constant 0.000000e+00 : f32
    %40 = vector.broadcast %cst_17 : f32 to vector<128x128xf32>
    %41 = arith.cmpf ogt, %39, %40 : vector<128x128xf32>
    %cst_18 = arith.constant 0.00999999977 : f32
    %42 = vector.broadcast %cst_18 : f32 to vector<128x128xf32>
    %43 = arith.mulf %42, %39 : vector<128x128xf32>
    %44 = arith.select %41, %39, %43 : vector<128x128xi1>, vector<128x128xf32>
    %45 = vector.extract_strided_slice %2 {offsets = [6, 0], sizes = [1, 128], strides = [1, 1]} : vector<16x128xf32> to vector<1x128xf32>
    %46 = arith.truncf %44 : vector<128x128xf32> to vector<128x128xbf16>
    %c0_19 = arith.constant 0 : index
    %c0_20 = arith.constant 0 : index
    %47 = vector.load %arg4[%c0_19, %c0_20] : memref<128x128xbf16, #tpu.memory_space<vmem>>, vector<128x128xbf16>
    %cst_21 = arith.constant dense<0.000000e+00> : vector<128x128xf32>
    %48 = tpu.matmul %46, %47, %cst_21 {dimension_numbers = #tpu.dot_dimension_numbers<[1], [0], [0], [1], [0, 0, 1, 1], [], []>} : vector<128x128xbf16>, vector<128x128xbf16>, vector<128x128xf32> -> vector<128x128xf32>
    %49 = arith.truncf %48 : vector<128x128xf32> to vector<128x128xbf16>
    %cst_22 = arith.constant dense<0.000000e+00> : vector<128x128xf32>
    %50 = tpu.matmul %0, %49, %cst_22 {dimension_numbers = #tpu.dot_dimension_numbers<[1], [0], [0], [1], [0, 0, 1, 1], [], []>} : vector<128x128xbf16>, vector<128x128xbf16>, vector<128x128xf32> -> vector<128x128xf32>
    %51 = vector.broadcast %45 : vector<1x128xf32> to vector<128x128xf32>
    %52 = arith.addf %50, %51 : vector<128x128xf32>
    %53 = vector.extract_strided_slice %2 {offsets = [7, 0], sizes = [1, 128], strides = [1, 1]} : vector<16x128xf32> to vector<1x128xf32>
    %54 = vector.broadcast %53 : vector<1x128xf32> to vector<128x128xf32>
    %55 = arith.mulf %52, %54 : vector<128x128xf32>
    %56 = vector.extract_strided_slice %2 {offsets = [8, 0], sizes = [1, 128], strides = [1, 1]} : vector<16x128xf32> to vector<1x128xf32>
    %57 = vector.broadcast %56 : vector<1x128xf32> to vector<128x128xf32>
    %58 = arith.addf %55, %57 : vector<128x128xf32>
    %cst_23 = arith.constant 0.000000e+00 : f32
    %59 = vector.broadcast %cst_23 : f32 to vector<128x128xf32>
    %60 = arith.cmpf ogt, %58, %59 : vector<128x128xf32>
    %cst_24 = arith.constant 0.00999999977 : f32
    %61 = vector.broadcast %cst_24 : f32 to vector<128x128xf32>
    %62 = arith.mulf %61, %58 : vector<128x128xf32>
    %63 = arith.select %60, %58, %62 : vector<128x128xi1>, vector<128x128xf32>
    %64 = vector.extract_strided_slice %2 {offsets = [9, 0], sizes = [1, 128], strides = [1, 1]} : vector<16x128xf32> to vector<1x128xf32>
    %65 = arith.truncf %63 : vector<128x128xf32> to vector<128x128xbf16>
    %c0_25 = arith.constant 0 : index
    %c0_26 = arith.constant 0 : index
    %66 = vector.load %arg5[%c0_25, %c0_26] : memref<128x128xbf16, #tpu.memory_space<vmem>>, vector<128x128xbf16>
    %cst_27 = arith.constant dense<0.000000e+00> : vector<128x128xf32>
    %67 = tpu.matmul %65, %66, %cst_27 {dimension_numbers = #tpu.dot_dimension_numbers<[1], [0], [0], [1], [0, 0, 1, 1], [], []>} : vector<128x128xbf16>, vector<128x128xbf16>, vector<128x128xf32> -> vector<128x128xf32>
    %68 = arith.truncf %67 : vector<128x128xf32> to vector<128x128xbf16>
    %cst_28 = arith.constant dense<0.000000e+00> : vector<128x128xf32>
    %69 = tpu.matmul %0, %68, %cst_28 {dimension_numbers = #tpu.dot_dimension_numbers<[1], [0], [0], [1], [0, 0, 1, 1], [], []>} : vector<128x128xbf16>, vector<128x128xbf16>, vector<128x128xf32> -> vector<128x128xf32>
    %70 = vector.broadcast %64 : vector<1x128xf32> to vector<128x128xf32>
    %71 = arith.addf %69, %70 : vector<128x128xf32>
    %72 = arith.addf %71, %7 : vector<128x128xf32>
    %73 = vector.extract_strided_slice %2 {offsets = [10, 0], sizes = [1, 128], strides = [1, 1]} : vector<16x128xf32> to vector<1x128xf32>
    %74 = vector.broadcast %73 : vector<1x128xf32> to vector<128x128xf32>
    %75 = arith.mulf %72, %74 : vector<128x128xf32>
    %76 = vector.extract_strided_slice %2 {offsets = [11, 0], sizes = [1, 128], strides = [1, 1]} : vector<16x128xf32> to vector<1x128xf32>
    %77 = vector.broadcast %76 : vector<1x128xf32> to vector<128x128xf32>
    %78 = arith.addf %75, %77 : vector<128x128xf32>
    %cst_29 = arith.constant dense<0.000000e+00> : vector<128xf32>
    %79 = vector.multi_reduction <add>, %78, %cst_29 [1] : vector<128x128xf32> to vector<128xf32>
    %80 = vector.shape_cast %79 : vector<128xf32> to vector<128x1xf32>
    %cst_30 = arith.constant 6.250000e-02 : f32
    %81 = vector.broadcast %cst_30 : f32 to vector<128x1xf32>
    %82 = arith.mulf %80, %81 : vector<128x1xf32>
    %83 = arith.mulf %78, %78 : vector<128x128xf32>
    %cst_31 = arith.constant dense<0.000000e+00> : vector<128xf32>
    %84 = vector.multi_reduction <add>, %83, %cst_31 [1] : vector<128x128xf32> to vector<128xf32>
    %85 = vector.shape_cast %84 : vector<128xf32> to vector<128x1xf32>
    %cst_32 = arith.constant 6.250000e-02 : f32
    %86 = vector.broadcast %cst_32 : f32 to vector<128x1xf32>
    %87 = arith.mulf %85, %86 : vector<128x1xf32>
    %88 = arith.mulf %82, %82 : vector<128x1xf32>
    %89 = arith.subf %87, %88 : vector<128x1xf32>
    %90 = vector.broadcast %82 : vector<128x1xf32> to vector<128x128xf32>
    %91 = arith.subf %78, %90 : vector<128x128xf32>
    %cst_33 = arith.constant 9.99999974E-6 : f32
    %92 = vector.broadcast %cst_33 : f32 to vector<128x1xf32>
    %93 = arith.addf %89, %92 : vector<128x1xf32>
    %94 = math.rsqrt %93 : vector<128x1xf32>
    %95 = vector.broadcast %94 : vector<128x1xf32> to vector<128x128xf32>
    %96 = arith.mulf %91, %95 : vector<128x128xf32>
    %97 = vector.extract_strided_slice %2 {offsets = [13, 0], sizes = [1, 128], strides = [1, 1]} : vector<16x128xf32> to vector<1x128xf32>
    %98 = vector.broadcast %97 : vector<1x128xf32> to vector<128x128xf32>
    %99 = arith.mulf %96, %98 : vector<128x128xf32>
    %100 = vector.extract_strided_slice %2 {offsets = [14, 0], sizes = [1, 128], strides = [1, 1]} : vector<16x128xf32> to vector<1x128xf32>
    %101 = vector.broadcast %100 : vector<1x128xf32> to vector<128x128xf32>
    %102 = arith.addf %99, %101 : vector<128x128xf32>
    %c0_34 = arith.constant 0 : index
    %c0_35 = arith.constant 0 : index
    %103 = vector.load %arg8[%c0_34, %c0_35] : memref<128x128xf32, #tpu.memory_space<vmem>>, vector<128x128xf32>
    tpu.vector_store %arg8[%c0_34, %c0_35], %102 {strides = array<i32>} : memref<128x128xf32, #tpu.memory_space<vmem>>, vector<128x128xf32>,
    return
  }
}

</mosaic_0001>

<llo_original>
// kernel: tpu_custom_call.1
$region0: #{tpu_custom_call.1}
  #allocation0 [shape = 'u32[]', space=smem, size = 0x4, offset = 0x4, fixed_abs, tag = 'smem constant byte address 0x4 - core index']
  #allocation1 [shape = 'u32[72,128]{1,0:T(1,128)}', space=vmem, size = 0x9000, scoped, tag = 'internal scratch']
  %s0 = inlined_call_operand.hbm [shape: bf16[128,128], index: 0, kind: input, shape index: {}]
  %s1 = inlined_call_operand.hbm [shape: bf16[128,128], index: 1, kind: input, shape index: {}]
  %s2 = inlined_call_operand.hbm [shape: bf16[128,128], index: 2, kind: input, shape index: {}]
  %s3 = inlined_call_operand.hbm [shape: bf16[128,128], index: 3, kind: input, shape index: {}]
  %s4 = inlined_call_operand.hbm [shape: bf16[128,128], index: 4, kind: input, shape index: {}]
  %s5 = inlined_call_operand.hbm [shape: bf16[128,128], index: 5, kind: input, shape index: {}]
  %s6 = inlined_call_operand.hbm [shape: bf16[128,128], index: 6, kind: input, shape index: {}]
  %s7 = inlined_call_operand.hbm [shape: f32[16,128], index: 7, kind: input, shape index: {}]
  %s8 = inlined_call_operand.hbm [shape: f32[128,128], index: 8, kind: output, shape index: {}]
  %s9 = sld [smem:[#allocation0]]
  $region74: #{tpu_custom_call.1} parent=0
    _
  %s11 = ssub.s32 1, %s9
  %s12 = scalar_select 0, %s11, %s9
  $region1: #{tpu_custom_call.1} parent=0
    #allocation2 [shape = 'u8[32768]{0}', space=vmem, size = 0x8000, scoped, tag = 'input window, operand 0, single buffered']
    #allocation3 [shape = 's32[1]{0}', space=sflag, size = 0x4, scoped, tag = 'scoped memory for tpu_custom_call.1']
    #allocation4 [shape = 's32[1]{0}', space=sflag, size = 0x4, scoped, tag = 'scoped memory for tpu_custom_call.1']
    #allocation5 [shape = 'u8[32768]{0}', space=vmem, size = 0x8000, scoped, tag = 'input window, operand 1, single buffered']
    #allocation6 [shape = 's32[1]{0}', space=sflag, size = 0x4, scoped, tag = 'scoped memory for tpu_custom_call.1']
    #allocation7 [shape = 'u8[32768]{0}', space=vmem, size = 0x8000, scoped, tag = 'input window, operand 2, single buffered']
    #allocation8 [shape = 'u8[32768]{0}', space=vmem, size = 0x8000, scoped, tag = 'input window, operand 3, single buffered']
    #allocation9 [shape = 's32[1]{0}', space=sflag, size = 0x4, scoped, tag = 'scoped memory for tpu_custom_call.1']
    #allocation10 [shape = 'u8[32768]{0}', space=vmem, size = 0x8000, scoped, tag = 'input window, operand 4, single buffered']
    #allocation11 [shape = 'u8[32768]{0}', space=vmem, size = 0x8000, scoped, tag = 'input window, operand 5, single buffered']
    #allocation12 [shape = 's32[1]{0}', space=sflag, size = 0x4, scoped, tag = 'scoped memory for tpu_custom_call.1']
    #allocation13 [shape = 'u8[32768]{0}', space=vmem, size = 0x8000, scoped, tag = 'input window, operand 6, single buffered']
    #allocation14 [shape = 'u8[8192]{0}', space=vmem, size = 0x2000, scoped, tag = 'input window, operand 7, single buffered']
    #allocation15 [shape = 's32[1]{0}', space=sflag, size = 0x4, scoped, tag = 'scoped memory for tpu_custom_call.1']
    #allocation16 [shape = 'u8[65536]{0}', space=vmem, size = 0x10000, scoped, tag = 'output window, operand 0, single buffered']
    %13 = vsyncpa [#allocation3], 0
    %14 = vsyncpa [#allocation6], 0
    %15 = vsyncpa [#allocation9], 0
    %16 = vsyncpa [#allocation12], 0
    %17 = vsyncpa [#allocation15], 0
    %18 = vsyncpa [#allocation4], 0
    // Predicated region
    $region2: #{tpu_custom_call.1} parent=1 // pred_check
      _
    $region3: #{tpu_custom_call.1} parent=1 // pred_check_branch
      %20 = sbr.rel (0) target = $region5
    $region4: #{tpu_custom_call.1} parent=1 // pred_region
      %22 = vsyncadd [#allocation3], 0
      %s23 = sshll.u32 %s0, 4
      %s24 = int_to_ptr.hbm [resolvable:$true] %s23
      %s25 = sshll.u32 [#allocation2], 4
      %s26 = int_to_ptr.vmem [resolvable:$true] %s25
      %31 = dma.hbm_to_vmem [thread:$0]  %s24, 1024, %s26, [#allocation3], 64, 64, 4
    $region5: #{tpu_custom_call.1} parent=1 // pred_fallthru
      _
    // Predicated region
    $region6: #{tpu_custom_call.1} parent=1 // pred_check
      _
    $region7: #{tpu_custom_call.1} parent=1 // pred_check_branch
      %33 = sbr.rel (0) target = $region9
    $region8: #{tpu_custom_call.1} parent=1 // pred_region
      %35 = vsyncadd [#allocation6], 0
      %s36 = sshll.u32 %s1, 4
      %s37 = int_to_ptr.hbm [resolvable:$true] %s36
      %s38 = sshll.u32 [#allocation5], 4
      %s39 = int_to_ptr.vmem [resolvable:$true] %s38
      %44 = dma.hbm_to_vmem [thread:$0]  %s37, 1024, %s39, [#allocation6], 64, 64, 4
    $region9: #{tpu_custom_call.1} parent=1 // pred_fallthru
      _
    // Predicated region
    $region10: #{tpu_custom_call.1} parent=1 // pred_check
      _
    $region11: #{tpu_custom_call.1} parent=1 // pred_check_branch
      %46 = sbr.rel (0) target = $region13
    $region12: #{tpu_custom_call.1} parent=1 // pred_region
      %48 = vsyncadd [#allocation6], 0
      %s49 = sshll.u32 %s2, 4
      %s50 = int_to_ptr.hbm [resolvable:$true] %s49
      %s51 = sshll.u32 [#allocation7], 4
      %s52 = int_to_ptr.vmem [resolvable:$true] %s51
      %57 = dma.hbm_to_vmem [thread:$0]  %s50, 1024, %s52, [#allocation6], 64, 64, 4
    $region13: #{tpu_custom_call.1} parent=1 // pred_fallthru
      _
    // Predicated region
    $region14: #{tpu_custom_call.1} parent=1 // pred_check
      _
    $region15: #{tpu_custom_call.1} parent=1 // pred_check_branch
      %59 = sbr.rel (0) target = $region17
    $region16: #{tpu_custom_call.1} parent=1 // pred_region
      %61 = vsyncadd [#allocation9], 0
      %s62 = sshll.u32 %s3, 4
      %s63 = int_to_ptr.hbm [resolvable:$true] %s62
      %s64 = sshll.u32 [#allocation8], 4
      %s65 = int_to_ptr.vmem [resolvable:$true] %s64
      %70 = dma.hbm_to_vmem [thread:$0]  %s63, 1024, %s65, [#allocation9], 64, 64, 4
    $region17: #{tpu_custom_call.1} parent=1 // pred_fallthru
      _
    // Predicated region
    $region18: #{tpu_custom_call.1} parent=1 // pred_check
      _
    $region19: #{tpu_custom_call.1} parent=1 // pred_check_branch
      %72 = sbr.rel (0) target = $region21
    $region20: #{tpu_custom_call.1} parent=1 // pred_region
      %74 = vsyncadd [#allocation9], 0
      %s75 = sshll.u32 %s4, 4
      %s76 = int_to_ptr.hbm [resolvable:$true] %s75
      %s77 = sshll.u32 [#allocation10], 4
      %s78 = int_to_ptr.vmem [resolvable:$true] %s77
      %83 = dma.hbm_to_vmem [thread:$0]  %s76, 1024, %s78, [#allocation9], 64, 64, 4
    $region21: #{tpu_custom_call.1} parent=1 // pred_fallthru
      _
    // Predicated region
    $region22: #{tpu_custom_call.1} parent=1 // pred_check
      _
    $region23: #{tpu_custom_call.1} parent=1 // pred_check_branch
      %85 = sbr.rel (0) target = $region25
    $region24: #{tpu_custom_call.1} parent=1 // pred_region
      %87 = vsyncadd [#allocation12], 0
      %s88 = sshll.u32 %s5, 4
      %s89 = int_to_ptr.hbm [resolvable:$true] %s88
      %s90 = sshll.u32 [#allocation11], 4
      %s91 = int_to_ptr.vmem [resolvable:$true] %s90
      %96 = dma.hbm_to_vmem [thread:$0]  %s89, 1024, %s91, [#allocation12], 64, 64, 4
    $region25: #{tpu_custom_call.1} parent=1 // pred_fallthru
      _
    // Predicated region
    $region26: #{tpu_custom_call.1} parent=1 // pred_check
      _
    $region27: #{tpu_custom_call.1} parent=1 // pred_check_branch
      %98 = sbr.rel (0) target = $region29
    $region28: #{tpu_custom_call.1} parent=1 // pred_region
      %100 = vsyncadd [#allocation12], 0
      %s101 = sshll.u32 %s6, 4
      %s102 = int_to_ptr.hbm [resolvable:$true] %s101
      %s103 = sshll.u32 [#allocation13], 4
      %s104 = int_to_ptr.vmem [resolvable:$true] %s103
      %109 = dma.hbm_to_vmem [thread:$0]  %s102, 1024, %s104, [#allocation12], 64, 64, 4
    $region29: #{tpu_custom_call.1} parent=1 // pred_fallthru
      _
    // Predicated region
    $region30: #{tpu_custom_call.1} parent=1 // pred_check
      _
    $region31: #{tpu_custom_call.1} parent=1 // pred_check_branch
      %111 = sbr.rel (0) target = $region33
    $region32: #{tpu_custom_call.1} parent=1 // pred_region
      %113 = vsyncadd [#allocation15], 0
      %s114 = sshll.u32 %s7, 4
      %s115 = int_to_ptr.hbm [resolvable:$true] %s114
      %s116 = sshll.u32 [#allocation14], 4
      %s117 = int_to_ptr.vmem [resolvable:$true] %s116
      %122 = dma.hbm_to_vmem [thread:$0]  %s115, 256, %s117, [#allocation15], 128, 128, 8
    $region33: #{tpu_custom_call.1} parent=1 // pred_fallthru
      _
    // Predicated region
    $region34: #{tpu_custom_call.1} parent=1 // pred_check
      _
    $region35: #{tpu_custom_call.1} parent=1 // pred_check_branch
      %124 = sbr.rel (0) target = $region37
    $region36: #{tpu_custom_call.1} parent=1 // pred_region
      %126 = dma.done [#allocation3], 1024
    $region37: #{tpu_custom_call.1} parent=1 // pred_fallthru
      _
    // Predicated region
    $region38: #{tpu_custom_call.1} parent=1 // pred_check
      _
    $region39: #{tpu_custom_call.1} parent=1 // pred_check_branch
      %128 = sbr.rel (0) target = $region41
    $region40: #{tpu_custom_call.1} parent=1 // pred_region
      %130 = dma.done [#allocation6], 1024
    $region41: #{tpu_custom_call.1} parent=1 // pred_fallthru
      _
    // Predicated region
    $region42: #{tpu_custom_call.1} parent=1 // pred_check
      _
    $region43: #{tpu_custom_call.1} parent=1 // pred_check_branch
      %132 = sbr.rel (0) target = $region45
    $region44: #{tpu_custom_call.1} parent=1 // pred_region
      %134 = dma.done [#allocation6], 1024
    $region45: #{tpu_custom_call.1} parent=1 // pred_fallthru
      _
    // Predicated region
    $region46: #{tpu_custom_call.1} parent=1 // pred_check
      _
    $region47: #{tpu_custom_call.1} parent=1 // pred_check_branch
      %136 = sbr.rel (0) target = $region49
    $region48: #{tpu_custom_call.1} parent=1 // pred_region
      %138 = dma.done [#allocation9], 1024
    $region49: #{tpu_custom_call.1} parent=1 // pred_fallthru
      _
    // Predicated region
    $region50: #{tpu_custom_call.1} parent=1 // pred_check
      _
    $region51: #{tpu_custom_call.1} parent=1 // pred_check_branch
      %140 = sbr.rel (0) target = $region53
    $region52: #{tpu_custom_call.1} parent=1 // pred_region
      %142 = dma.done [#allocation9], 1024
    $region53: #{tpu_custom_call.1} parent=1 // pred_fallthru
      _
    // Predicated region
    $region54: #{tpu_custom_call.1} parent=1 // pred_check
      _
    $region55: #{tpu_custom_call.1} parent=1 // pred_check_branch
      %144 = sbr.rel (0) target = $region57
    $region56: #{tpu_custom_call.1} parent=1 // pred_region
      %146 = dma.done [#allocation12], 1024
    $region57: #{tpu_custom_call.1} parent=1 // pred_fallthru
      _
    // Predicated region
    $region58: #{tpu_custom_call.1} parent=1 // pred_check
      _
    $region59: #{tpu_custom_call.1} parent=1 // pred_check_branch
      %148 = sbr.rel (0) target = $region61
    $region60: #{tpu_custom_call.1} parent=1 // pred_region
      %150 = dma.done [#allocation12], 1024
    $region61: #{tpu_custom_call.1} parent=1 // pred_fallthru
      _
    // Predicated region
    $region62: #{tpu_custom_call.1} parent=1 // pred_check
      _
    $region63: #{tpu_custom_call.1} parent=1 // pred_check_branch
      %152 = sbr.rel (0) target = $region65
    $region64: #{tpu_custom_call.1} parent=1 // pred_region
      %154 = dma.done [#allocation15], 256
    $region65: #{tpu_custom_call.1} parent=1 // pred_fallthru
      _
    %v155 = vld [vmem:[#allocation2] sm:$0xf]
    %v156 = vld [vmem:[#allocation2 + $0x4] sm:$0xf]
    %v157 = vld [vmem:[#allocation2 + $0x8] sm:$0xf]
    %v158 = vld [vmem:[#allocation2 + $0xc] sm:$0xf]
    %v159 = vld [vmem:[#allocation2 + $0x10] sm:$0xf]
    %v160 = vld [vmem:[#allocation2 + $0x14] sm:$0xf]
    %v161 = vld [vmem:[#allocation2 + $0x18] sm:$0xf]
    %v162 = vld [vmem:[#allocation2 + $0x1c] sm:$0xf]
    %v163 = vld [vmem:[#allocation2 + $0x20] sm:$0xf]
    %v164 = vld [vmem:[#allocation2 + $0x24] sm:$0xf]
    %v165 = vld [vmem:[#allocation2 + $0x28] sm:$0xf]
    %v166 = vld [vmem:[#allocation2 + $0x2c] sm:$0xf]
    %v167 = vld [vmem:[#allocation2 + $0x30] sm:$0xf]
    %v168 = vld [vmem:[#allocation2 + $0x34] sm:$0xf]
    %v169 = vld [vmem:[#allocation2 + $0x38] sm:$0xf]
    %v170 = vld [vmem:[#allocation2 + $0x3c] sm:$0xf]
    %v171 = vld [vmem:[#allocation5] sm:$0xf]
    %v172 = vld [vmem:[#allocation5 + $0x4] sm:$0xf]
    %v173 = vld [vmem:[#allocation5 + $0x8] sm:$0xf]
    %v174 = vld [vmem:[#allocation5 + $0xc] sm:$0xf]
    %v175 = vld [vmem:[#allocation5 + $0x10] sm:$0xf]
    %v176 = vld [vmem:[#allocation5 + $0x14] sm:$0xf]
    %v177 = vld [vmem:[#allocation5 + $0x18] sm:$0xf]
    %v178 = vld [vmem:[#allocation5 + $0x1c] sm:$0xf]
    %v179 = vld [vmem:[#allocation5 + $0x20] sm:$0xf]
    %v180 = vld [vmem:[#allocation5 + $0x24] sm:$0xf]
    %v181 = vld [vmem:[#allocation5 + $0x28] sm:$0xf]
    %v182 = vld [vmem:[#allocation5 + $0x2c] sm:$0xf]
    %v183 = vld [vmem:[#allocation5 + $0x30] sm:$0xf]
    %v184 = vld [vmem:[#allocation5 + $0x34] sm:$0xf]
    %v185 = vld [vmem:[#allocation5 + $0x38] sm:$0xf]
    %v186 = vld [vmem:[#allocation5 + $0x3c] sm:$0xf]
    %v187 = vld [vmem:[#allocation14] sm:$0xff]
    %v188 = vld [vmem:[#allocation14 + $0x8] sm:$0xff]
    %v189 = vld [vmem:[#allocation13] sm:$0xf]
    %v190 = vld [vmem:[#allocation13 + $0x4] sm:$0xf]
    %v191 = vld [vmem:[#allocation13 + $0x8] sm:$0xf]
    %v192 = vld [vmem:[#allocation13 + $0xc] sm:$0xf]
    %v193 = vld [vmem:[#allocation13 + $0x10] sm:$0xf]
    %v194 = vld [vmem:[#allocation13 + $0x14] sm:$0xf]
    %v195 = vld [vmem:[#allocation13 + $0x18] sm:$0xf]
    %v196 = vld [vmem:[#allocation13 + $0x1c] sm:$0xf]
    %v197 = vld [vmem:[#allocation13 + $0x20] sm:$0xf]
    %v198 = vld [vmem:[#allocation13 + $0x24] sm:$0xf]
    %v199 = vld [vmem:[#allocation13 + $0x28] sm:$0xf]
    %v200 = vld [vmem:[#allocation13 + $0x2c] sm:$0xf]
    %v201 = vld [vmem:[#allocation13 + $0x30] sm:$0xf]
    %v202 = vld [vmem:[#allocation13 + $0x34] sm:$0xf]
    %v203 = vld [vmem:[#allocation13 + $0x38] sm:$0xf]
    %v204 = vld [vmem:[#allocation13 + $0x3c] sm:$0xf]
    %v205 = vperm.slane %v188, 4
    %v222 = vunpack.c.l.b16 %v171
    %v223 = vunpack.c.l.b16 %v172
    %v224 = vunpack.c.l.b16 %v173
    %v225 = vunpack.c.l.b16 %v174
    %v226 = vunpack.c.l.b16 %v175
    %v227 = vunpack.c.l.b16 %v176
    %v228 = vunpack.c.l.b16 %v177
    %v229 = vunpack.c.l.b16 %v178
    %v230 = vunpack.c.l.b16 %v179
    %v231 = vunpack.c.l.b16 %v180
    %v232 = vunpack.c.l.b16 %v181
    %v233 = vunpack.c.l.b16 %v182
    %v234 = vunpack.c.l.b16 %v183
    %v235 = vunpack.c.l.b16 %v184
    %v236 = vunpack.c.l.b16 %v185
    %v237 = vunpack.c.l.b16 %v186
    %v238 = vpack.c.b16 %v223, %v222
    %v239 = vpack.c.b16 %v225, %v224
    %v240 = vpack.c.b16 %v227, %v226
    %v241 = vpack.c.b16 %v229, %v228
    %v242 = vpack.c.b16 %v231, %v230
    %v243 = vpack.c.b16 %v233, %v232
    %v244 = vpack.c.b16 %v235, %v234
    %v245 = vpack.c.b16 %v237, %v236
    %v270 = vunpack.c.l.b16 %v189
    %v271 = vunpack.c.l.b16 %v190
    %v272 = vunpack.c.l.b16 %v191
    %v273 = vunpack.c.l.b16 %v192
    %v274 = vunpack.c.l.b16 %v193
    %v275 = vunpack.c.l.b16 %v194
    %v276 = vunpack.c.l.b16 %v195
    %v277 = vunpack.c.l.b16 %v196
    %v278 = vunpack.c.l.b16 %v197
    %v279 = vunpack.c.l.b16 %v198
    %v280 = vunpack.c.l.b16 %v199
    %v281 = vunpack.c.l.b16 %v200
    %v282 = vunpack.c.l.b16 %v201
    %v283 = vunpack.c.l.b16 %v202
    %v284 = vunpack.c.l.b16 %v203
    %v285 = vunpack.c.l.b16 %v204
    %v286 = vpack.c.b16 %v271, %v270
    %v287 = vpack.c.b16 %v273, %v272
    %v288 = vpack.c.b16 %v275, %v274
    %v289 = vpack.c.b16 %v277, %v276
    %v290 = vpack.c.b16 %v279, %v278
    %v291 = vpack.c.b16 %v281, %v280
    %v292 = vpack.c.b16 %v283, %v282
    %v293 = vpack.c.b16 %v285, %v284
    %302 = vmatpush.bf16.msra.mxu0 %v293
    %303 = vmatpush.bf16.msra.mxu0 %v292
    %304 = vmatpush.bf16.msra.mxu0 %v291
    %305 = vmatpush.bf16.msra.mxu0 %v290
    %306 = vmatpush.bf16.msra.mxu0 %v289
    %307 = vmatpush.bf16.msra.mxu0 %v288
    %308 = vmatpush.bf16.msra.mxu0 %v287
    %309 = vmatpush.bf16.msra.mxu0 %v286
    %310 = vmatmul.bf16.gmra.mxu0 %v238
    %v311 = vpop.f32.mrf.mxu0
    %v312 = vadd.f32 %v205, %v311
    %v313 = vpop.f32.mrf.mxu0
    %v314 = vadd.f32 %v205, %v313
    %315 = vmatmul.bf16.gmra.mxu0 %v239
    %v316 = vpop.f32.mrf.mxu0
    %v317 = vadd.f32 %v205, %v316
    %v318 = vpop.f32.mrf.mxu0
    %v319 = vadd.f32 %v205, %v318
    %320 = vmatmul.bf16.gmra.mxu0 %v240
    %v321 = vpop.f32.mrf.mxu0
    %v322 = vadd.f32 %v205, %v321
    %v323 = vpop.f32.mrf.mxu0
    %v324 = vadd.f32 %v205, %v323
    %325 = vmatmul.bf16.gmra.mxu0 %v241
    %v326 = vpop.f32.mrf.mxu0
    %v327 = vadd.f32 %v205, %v326
    %v328 = vpop.f32.mrf.mxu0
    %v329 = vadd.f32 %v205, %v328
    %330 = vmatmul.bf16.gmra.mxu0 %v242
    %v331 = vpop.f32.mrf.mxu0
    %v332 = vadd.f32 %v205, %v331
    %v333 = vpop.f32.mrf.mxu0
    %v334 = vadd.f32 %v205, %v333
    %335 = vmatmul.bf16.gmra.mxu0 %v243
    %v336 = vpop.f32.mrf.mxu0
    %v337 = vadd.f32 %v205, %v336
    %v338 = vpop.f32.mrf.mxu0
    %v339 = vadd.f32 %v205, %v338
    %340 = vmatmul.bf16.gmra.mxu0 %v244
    %v341 = vpop.f32.mrf.mxu0
    %v342 = vadd.f32 %v205, %v341
    %v343 = vpop.f32.mrf.mxu0
    %v344 = vadd.f32 %v205, %v343
    %345 = vmatmul.bf16.gmra.mxu0 %v245
    %v346 = vpop.f32.mrf.mxu0
    %v347 = vadd.f32 %v205, %v346
    %v348 = vpop.f32.mrf.mxu0
    %v349 = vadd.f32 %v205, %v348
    %350 = vdwg.mxu0
    %v351 = vld [vmem:[#allocation7] sm:$0xf]
    %v352 = vld [vmem:[#allocation7 + $0x4] sm:$0xf]
    %v353 = vld [vmem:[#allocation7 + $0x8] sm:$0xf]
    %v354 = vld [vmem:[#allocation7 + $0xc] sm:$0xf]
    %v355 = vld [vmem:[#allocation7 + $0x10] sm:$0xf]
    %v356 = vld [vmem:[#allocation7 + $0x14] sm:$0xf]
    %v357 = vld [vmem:[#allocation7 + $0x18] sm:$0xf]
    %v358 = vld [vmem:[#allocation7 + $0x1c] sm:$0xf]
    %v359 = vld [vmem:[#allocation7 + $0x20] sm:$0xf]
    %v360 = vld [vmem:[#allocation7 + $0x24] sm:$0xf]
    %v361 = vld [vmem:[#allocation7 + $0x28] sm:$0xf]
    %v362 = vld [vmem:[#allocation7 + $0x2c] sm:$0xf]
    %v363 = vld [vmem:[#allocation7 + $0x30] sm:$0xf]
    %v364 = vld [vmem:[#allocation7 + $0x34] sm:$0xf]
    %v365 = vld [vmem:[#allocation7 + $0x38] sm:$0xf]
    %v366 = vld [vmem:[#allocation7 + $0x3c] sm:$0xf]
    %v383 = vunpack.c.l.b16 %v155
    %v384 = vunpack.c.l.b16 %v156
    %v385 = vunpack.c.l.b16 %v157
    %v386 = vunpack.c.l.b16 %v158
    %v387 = vunpack.c.l.b16 %v159
    %v388 = vunpack.c.l.b16 %v160
    %v389 = vunpack.c.l.b16 %v161
    %v390 = vunpack.c.l.b16 %v162
    %v391 = vunpack.c.l.b16 %v163
    %v392 = vunpack.c.l.b16 %v164
    %v393 = vunpack.c.l.b16 %v165
    %v394 = vunpack.c.l.b16 %v166
    %v395 = vunpack.c.l.b16 %v167
    %v396 = vunpack.c.l.b16 %v168
    %v397 = vunpack.c.l.b16 %v169
    %v398 = vunpack.c.l.b16 %v170
    %v399 = vpack.c.b16 %v384, %v383
    %v400 = vpack.c.b16 %v386, %v385
    %v401 = vpack.c.b16 %v388, %v387
    %v402 = vpack.c.b16 %v390, %v389
    %v403 = vpack.c.b16 %v392, %v391
    %v404 = vpack.c.b16 %v394, %v393
    %v405 = vpack.c.b16 %v396, %v395
    %v406 = vpack.c.b16 %v398, %v397
    %415 = vmatpush.bf16.msra.mxu0 %v245
    %416 = vmatpush.bf16.msra.mxu0 %v244
    %417 = vmatpush.bf16.msra.mxu0 %v243
    %418 = vmatpush.bf16.msra.mxu0 %v242
    %419 = vmatpush.bf16.msra.mxu0 %v241
    %420 = vmatpush.bf16.msra.mxu0 %v240
    %421 = vmatpush.bf16.msra.mxu0 %v239
    %422 = vmatpush.bf16.msra.mxu0 %v238
    %423 = vmatmul.bf16.gmra.mxu0 %v399
    %v424 = vpop.f32.mrf.mxu0
    %v425 = vadd.f32 0.0, %v424
    %v426 = vpop.f32.mrf.mxu0
    %v427 = vadd.f32 0.0, %v426
    %428 = vmatmul.bf16.gmra.mxu0 %v400
    %v429 = vpop.f32.mrf.mxu0
    %v430 = vadd.f32 0.0, %v429
    %v431 = vpop.f32.mrf.mxu0
    %v432 = vadd.f32 0.0, %v431
    %433 = vmatmul.bf16.gmra.mxu0 %v401
    %v434 = vpop.f32.mrf.mxu0
    %v435 = vadd.f32 0.0, %v434
    %v436 = vpop.f32.mrf.mxu0
    %v437 = vadd.f32 0.0, %v436
    %438 = vmatmul.bf16.gmra.mxu0 %v402
    %v439 = vpop.f32.mrf.mxu0
    %v440 = vadd.f32 0.0, %v439
    %v441 = vpop.f32.mrf.mxu0
    %v442 = vadd.f32 0.0, %v441
    %443 = vmatmul.bf16.gmra.mxu0 %v403
    %v444 = vpop.f32.mrf.mxu0
    %v445 = vadd.f32 0.0, %v444
    %v446 = vpop.f32.mrf.mxu0
    %v447 = vadd.f32 0.0, %v446
    %448 = vmatmul.bf16.gmra.mxu0 %v404
    %v449 = vpop.f32.mrf.mxu0
    %v450 = vadd.f32 0.0, %v449
    %v451 = vpop.f32.mrf.mxu0
    %v452 = vadd.f32 0.0, %v451
    %453 = vmatmul.bf16.gmra.mxu0 %v405
    %v454 = vpop.f32.mrf.mxu0
    %v455 = vadd.f32 0.0, %v454
    %v456 = vpop.f32.mrf.mxu0
    %v457 = vadd.f32 0.0, %v456
    %458 = vmatmul.bf16.gmra.mxu0 %v406
    %v459 = vpop.f32.mrf.mxu0
    %v460 = vadd.f32 0.0, %v459
    %v461 = vpop.f32.mrf.mxu0
    %v462 = vadd.f32 0.0, %v461
    %463 = vdwg.mxu0
    %v464 = vpack.c.bf16 %v427, %v425
    %v465 = vpack.c.bf16 %v432, %v430
    %v466 = vpack.c.bf16 %v437, %v435
    %v467 = vpack.c.bf16 %v442, %v440
    %v468 = vpack.c.bf16 %v447, %v445
    %v469 = vpack.c.bf16 %v452, %v450
    %v470 = vpack.c.bf16 %v457, %v455
    %v471 = vpack.c.bf16 %v462, %v460
    %v472 = vperm.slane %v187, 0
    %v489 = vunpack.c.l.b16 %v351
    %v490 = vunpack.c.l.b16 %v352
    %v491 = vunpack.c.l.b16 %v353
    %v492 = vunpack.c.l.b16 %v354
    %v493 = vunpack.c.l.b16 %v355
    %v494 = vunpack.c.l.b16 %v356
    %v495 = vunpack.c.l.b16 %v357
    %v496 = vunpack.c.l.b16 %v358
    %v497 = vunpack.c.l.b16 %v359
    %v498 = vunpack.c.l.b16 %v360
    %v499 = vunpack.c.l.b16 %v361
    %v500 = vunpack.c.l.b16 %v362
    %v501 = vunpack.c.l.b16 %v363
    %v502 = vunpack.c.l.b16 %v364
    %v503 = vunpack.c.l.b16 %v365
    %v504 = vunpack.c.l.b16 %v366
    %v505 = vpack.c.b16 %v490, %v489
    %v506 = vpack.c.b16 %v492, %v491
    %v507 = vpack.c.b16 %v494, %v493
    %v508 = vpack.c.b16 %v496, %v495
    %v509 = vpack.c.b16 %v498, %v497
    %v510 = vpack.c.b16 %v500, %v499
    %v511 = vpack.c.b16 %v502, %v501
    %v512 = vpack.c.b16 %v504, %v503
    %521 = vmatpush.bf16.msra.mxu0 %v512
    %522 = vmatpush.bf16.msra.mxu0 %v511
    %523 = vmatpush.bf16.msra.mxu0 %v510
    %524 = vmatpush.bf16.msra.mxu0 %v509
    %525 = vmatpush.bf16.msra.mxu0 %v508
    %526 = vmatpush.bf16.msra.mxu0 %v507
    %527 = vmatpush.bf16.msra.mxu0 %v506
    %528 = vmatpush.bf16.msra.mxu0 %v505
    %529 = vmatmul.bf16.gmra.mxu0 %v464
    %v530 = vpop.f32.mrf.mxu0
    %v531 = vadd.f32 %v472, %v530
    %v532 = vpop.f32.mrf.mxu0
    %v533 = vadd.f32 %v472, %v532
    %534 = vmatmul.bf16.gmra.mxu0 %v465
    %v535 = vpop.f32.mrf.mxu0
    %v536 = vadd.f32 %v472, %v535
    %v537 = vpop.f32.mrf.mxu0
    %v538 = vadd.f32 %v472, %v537
    %539 = vmatmul.bf16.gmra.mxu0 %v466
    %v540 = vpop.f32.mrf.mxu0
    %v541 = vadd.f32 %v472, %v540
    %v542 = vpop.f32.mrf.mxu0
    %v543 = vadd.f32 %v472, %v542
    %544 = vmatmul.bf16.gmra.mxu0 %v467
    %v545 = vpop.f32.mrf.mxu0
    %v546 = vadd.f32 %v472, %v545
    %v547 = vpop.f32.mrf.mxu0
    %v548 = vadd.f32 %v472, %v547
    %549 = vmatmul.bf16.gmra.mxu0 %v468
    %v550 = vpop.f32.mrf.mxu0
    %v551 = vadd.f32 %v472, %v550
    %v552 = vpop.f32.mrf.mxu0
    %v553 = vadd.f32 %v472, %v552
    %554 = vmatmul.bf16.gmra.mxu0 %v469
    %v555 = vpop.f32.mrf.mxu0
    %v556 = vadd.f32 %v472, %v555
    %v557 = vpop.f32.mrf.mxu0
    %v558 = vadd.f32 %v472, %v557
    %559 = vmatmul.bf16.gmra.mxu0 %v470
    %v560 = vpop.f32.mrf.mxu0
    %v561 = vadd.f32 %v472, %v560
    %v562 = vpop.f32.mrf.mxu0
    %v563 = vadd.f32 %v472, %v562
    %564 = vmatmul.bf16.gmra.mxu0 %v471
    %v565 = vpop.f32.mrf.mxu0
    %v566 = vadd.f32 %v472, %v565
    %v567 = vpop.f32.mrf.mxu0
    %v568 = vadd.f32 %v472, %v567
    %569 = vdwg.mxu0
    %v570 = vperm.slane %v187, 1
    %v571 = vmul.f32 %v531, %v570
    %v572 = vmul.f32 %v533, %v570
    %v573 = vmul.f32 %v536, %v570
    %v574 = vmul.f32 %v538, %v570
    %v575 = vmul.f32 %v541, %v570
    %v576 = vmul.f32 %v543, %v570
    %v577 = vmul.f32 %v546, %v570
    %v578 = vmul.f32 %v548, %v570
    %v579 = vmul.f32 %v551, %v570
    %v580 = vmul.f32 %v553, %v570
    %v581 = vmul.f32 %v556, %v570
    %v582 = vmul.f32 %v558, %v570
    %v583 = vmul.f32 %v561, %v570
    %v584 = vmul.f32 %v563, %v570
    %v585 = vmul.f32 %v566, %v570
    %v586 = vmul.f32 %v568, %v570
    %v587 = vperm.slane %v187, 2
    %v588 = vadd.f32 %v571, %v587
    %v589 = vadd.f32 %v572, %v587
    %v590 = vadd.f32 %v573, %v587
    %v591 = vadd.f32 %v574, %v587
    %v592 = vadd.f32 %v575, %v587
    %v593 = vadd.f32 %v576, %v587
    %v594 = vadd.f32 %v577, %v587
    %v595 = vadd.f32 %v578, %v587
    %v596 = vadd.f32 %v579, %v587
    %v597 = vadd.f32 %v580, %v587
    %v598 = vadd.f32 %v581, %v587
    %v599 = vadd.f32 %v582, %v587
    %v600 = vadd.f32 %v583, %v587
    %v601 = vadd.f32 %v584, %v587
    %v602 = vadd.f32 %v585, %v587
    %v603 = vadd.f32 %v586, %v587
    %vm604 = vcmp.gt.f32.partialorder %v588, 0.0
    %vm605 = vcmp.gt.f32.partialorder %v589, 0.0
    %vm606 = vcmp.gt.f32.partialorder %v590, 0.0
    %vm607 = vcmp.gt.f32.partialorder %v591, 0.0
    %vm608 = vcmp.gt.f32.partialorder %v592, 0.0
    %vm609 = vcmp.gt.f32.partialorder %v593, 0.0
    %vm610 = vcmp.gt.f32.partialorder %v594, 0.0
    %vm611 = vcmp.gt.f32.partialorder %v595, 0.0
    %vm612 = vcmp.gt.f32.partialorder %v596, 0.0
    %vm613 = vcmp.gt.f32.partialorder %v597, 0.0
    %vm614 = vcmp.gt.f32.partialorder %v598, 0.0
    %vm615 = vcmp.gt.f32.partialorder %v599, 0.0
    %vm616 = vcmp.gt.f32.partialorder %v600, 0.0
    %vm617 = vcmp.gt.f32.partialorder %v601, 0.0
    %vm618 = vcmp.gt.f32.partialorder %v602, 0.0
    %vm619 = vcmp.gt.f32.partialorder %v603, 0.0
    %v620 = vmul.f32 %v588, 0.01
    %v621 = vmul.f32 %v589, 0.01
    %v622 = vmul.f32 %v590, 0.01
    %v623 = vmul.f32 %v591, 0.01
    %v624 = vmul.f32 %v592, 0.01
    %v625 = vmul.f32 %v593, 0.01
    %v626 = vmul.f32 %v594, 0.01
    %v627 = vmul.f32 %v595, 0.01
    %v628 = vmul.f32 %v596, 0.01
    %v629 = vmul.f32 %v597, 0.01
    %v630 = vmul.f32 %v598, 0.01
    %v631 = vmul.f32 %v599, 0.01
    %v632 = vmul.f32 %v600, 0.01
    %v633 = vmul.f32 %v601, 0.01
    %v634 = vmul.f32 %v602, 0.01
    %v635 = vmul.f32 %v603, 0.01
    %v636 = vsel %vm604, %v588, %v620
    %v637 = vsel %vm605, %v589, %v621
    %v638 = vsel %vm606, %v590, %v622
    %v639 = vsel %vm607, %v591, %v623
    %v640 = vsel %vm608, %v592, %v624
    %v641 = vsel %vm609, %v593, %v625
    %v642 = vsel %vm610, %v594, %v626
    %v643 = vsel %vm611, %v595, %v627
    %v644 = vsel %vm612, %v596, %v628
    %v645 = vsel %vm613, %v597, %v629
    %v646 = vsel %vm614, %v598, %v630
    %v647 = vsel %vm615, %v599, %v631
    %v648 = vsel %vm616, %v600, %v632
    %v649 = vsel %vm617, %v601, %v633
    %v650 = vsel %vm618, %v602, %v634
    %v651 = vsel %vm619, %v603, %v635
    %v652 = vpack.c.bf16 %v637, %v636
    %v653 = vpack.c.bf16 %v639, %v638
    %v654 = vpack.c.bf16 %v641, %v640
    %v655 = vpack.c.bf16 %v643, %v642
    %v656 = vpack.c.bf16 %v645, %v644
    %v657 = vpack.c.bf16 %v647, %v646
    %v658 = vpack.c.bf16 %v649, %v648
    %v659 = vpack.c.bf16 %v651, %v650
    %v660 = vld [vmem:[#allocation8] sm:$0xf]
    %v661 = vld [vmem:[#allocation8 + $0x4] sm:$0xf]
    %v662 = vld [vmem:[#allocation8 + $0x8] sm:$0xf]
    %v663 = vld [vmem:[#allocation8 + $0xc] sm:$0xf]
    %v664 = vld [vmem:[#allocation8 + $0x10] sm:$0xf]
    %v665 = vld [vmem:[#allocation8 + $0x14] sm:$0xf]
    %v666 = vld [vmem:[#allocation8 + $0x18] sm:$0xf]
    %v667 = vld [vmem:[#allocation8 + $0x1c] sm:$0xf]
    %v668 = vld [vmem:[#allocation8 + $0x20] sm:$0xf]
    %v669 = vld [vmem:[#allocation8 + $0x24] sm:$0xf]
    %v670 = vld [vmem:[#allocation8 + $0x28] sm:$0xf]
    %v671 = vld [vmem:[#allocation8 + $0x2c] sm:$0xf]
    %v672 = vld [vmem:[#allocation8 + $0x30] sm:$0xf]
    %v673 = vld [vmem:[#allocation8 + $0x34] sm:$0xf]
    %v674 = vld [vmem:[#allocation8 + $0x38] sm:$0xf]
    %v675 = vld [vmem:[#allocation8 + $0x3c] sm:$0xf]
    %v692 = vunpack.c.l.b16 %v660
    %v693 = vunpack.c.l.b16 %v661
    %v694 = vunpack.c.l.b16 %v662
    %v695 = vunpack.c.l.b16 %v663
    %v696 = vunpack.c.l.b16 %v664
    %v697 = vunpack.c.l.b16 %v665
    %v698 = vunpack.c.l.b16 %v666
    %v699 = vunpack.c.l.b16 %v667
    %v700 = vunpack.c.l.b16 %v668
    %v701 = vunpack.c.l.b16 %v669
    %v702 = vunpack.c.l.b16 %v670
    %v703 = vunpack.c.l.b16 %v671
    %v704 = vunpack.c.l.b16 %v672
    %v705 = vunpack.c.l.b16 %v673
    %v706 = vunpack.c.l.b16 %v674
    %v707 = vunpack.c.l.b16 %v675
    %v708 = vpack.c.b16 %v693, %v692
    %v709 = vpack.c.b16 %v695, %v694
    %v710 = vpack.c.b16 %v697, %v696
    %v711 = vpack.c.b16 %v699, %v698
    %v712 = vpack.c.b16 %v701, %v700
    %v713 = vpack.c.b16 %v703, %v702
    %v714 = vpack.c.b16 %v705, %v704
    %v715 = vpack.c.b16 %v707, %v706
    %724 = vmatpush.bf16.msra.mxu0 %v715
    %725 = vmatpush.bf16.msra.mxu0 %v714
    %726 = vmatpush.bf16.msra.mxu0 %v713
    %727 = vmatpush.bf16.msra.mxu0 %v712
    %728 = vmatpush.bf16.msra.mxu0 %v711
    %729 = vmatpush.bf16.msra.mxu0 %v710
    %730 = vmatpush.bf16.msra.mxu0 %v709
    %731 = vmatpush.bf16.msra.mxu0 %v708
    %732 = vmatmul.bf16.gmra.mxu0 %v652
    %v733 = vpop.f32.mrf.mxu0
    %v734 = vadd.f32 0.0, %v733
    %v735 = vpop.f32.mrf.mxu0
    %v736 = vadd.f32 0.0, %v735
    %737 = vmatmul.bf16.gmra.mxu0 %v653
    %v738 = vpop.f32.mrf.mxu0
    %v739 = vadd.f32 0.0, %v738
    %v740 = vpop.f32.mrf.mxu0
    %v741 = vadd.f32 0.0, %v740
    %742 = vmatmul.bf16.gmra.mxu0 %v654
    %v743 = vpop.f32.mrf.mxu0
    %v744 = vadd.f32 0.0, %v743
    %v745 = vpop.f32.mrf.mxu0
    %v746 = vadd.f32 0.0, %v745
    %747 = vmatmul.bf16.gmra.mxu0 %v655
    %v748 = vpop.f32.mrf.mxu0
    %v749 = vadd.f32 0.0, %v748
    %v750 = vpop.f32.mrf.mxu0
    %v751 = vadd.f32 0.0, %v750
    %752 = vmatmul.bf16.gmra.mxu0 %v656
    %v753 = vpop.f32.mrf.mxu0
    %v754 = vadd.f32 0.0, %v753
    %v755 = vpop.f32.mrf.mxu0
    %v756 = vadd.f32 0.0, %v755
    %757 = vmatmul.bf16.gmra.mxu0 %v657
    %v758 = vpop.f32.mrf.mxu0
    %v759 = vadd.f32 0.0, %v758
    %v760 = vpop.f32.mrf.mxu0
    %v761 = vadd.f32 0.0, %v760
    %762 = vmatmul.bf16.gmra.mxu0 %v658
    %v763 = vpop.f32.mrf.mxu0
    %v764 = vadd.f32 0.0, %v763
    %v765 = vpop.f32.mrf.mxu0
    %v766 = vadd.f32 0.0, %v765
    %767 = vmatmul.bf16.gmra.mxu0 %v659
    %v768 = vpop.f32.mrf.mxu0
    %v769 = vadd.f32 0.0, %v768
    %v770 = vpop.f32.mrf.mxu0
    %v771 = vadd.f32 0.0, %v770
    %772 = vdwg.mxu0
    %v773 = vpack.c.bf16 %v736, %v734
    %v774 = vpack.c.bf16 %v741, %v739
    %v775 = vpack.c.bf16 %v746, %v744
    %v776 = vpack.c.bf16 %v751, %v749
    %v777 = vpack.c.bf16 %v756, %v754
    %v778 = vpack.c.bf16 %v761, %v759
    %v779 = vpack.c.bf16 %v766, %v764
    %v780 = vpack.c.bf16 %v771, %v769
    %v781 = vperm.slane %v187, 3
    %782 = vmatpush.bf16.msra.mxu0 %v780
    %783 = vmatpush.bf16.msra.mxu0 %v779
    %784 = vmatpush.bf16.msra.mxu0 %v778
    %785 = vmatpush.bf16.msra.mxu0 %v777
    %786 = vmatpush.bf16.msra.mxu0 %v776
    %787 = vmatpush.bf16.msra.mxu0 %v775
    %788 = vmatpush.bf16.msra.mxu0 %v774
    %789 = vmatpush.bf16.msra.mxu0 %v773
    %790 = vmatmul.bf16.gmra.mxu0 %v399
    %v791 = vpop.f32.mrf.mxu0
    %v792 = vadd.f32 %v781, %v791
    %v793 = vpop.f32.mrf.mxu0
    %v794 = vadd.f32 %v781, %v793
    %795 = vmatmul.bf16.gmra.mxu0 %v400
    %v796 = vpop.f32.mrf.mxu0
    %v797 = vadd.f32 %v781, %v796
    %v798 = vpop.f32.mrf.mxu0
    %v799 = vadd.f32 %v781, %v798
    %800 = vmatmul.bf16.gmra.mxu0 %v401
    %v801 = vpop.f32.mrf.mxu0
    %v802 = vadd.f32 %v781, %v801
    %v803 = vpop.f32.mrf.mxu0
    %v804 = vadd.f32 %v781, %v803
    %805 = vmatmul.bf16.gmra.mxu0 %v402
    %v806 = vpop.f32.mrf.mxu0
    %v807 = vadd.f32 %v781, %v806
    %v808 = vpop.f32.mrf.mxu0
    %v809 = vadd.f32 %v781, %v808
    %810 = vmatmul.bf16.gmra.mxu0 %v403
    %v811 = vpop.f32.mrf.mxu0
    %v812 = vadd.f32 %v781, %v811
    %v813 = vpop.f32.mrf.mxu0
    %v814 = vadd.f32 %v781, %v813
    %815 = vmatmul.bf16.gmra.mxu0 %v404
    %v816 = vpop.f32.mrf.mxu0
    %v817 = vadd.f32 %v781, %v816
    %v818 = vpop.f32.mrf.mxu0
    %v819 = vadd.f32 %v781, %v818
    %820 = vmatmul.bf16.gmra.mxu0 %v405
    %v821 = vpop.f32.mrf.mxu0
    %v822 = vadd.f32 %v781, %v821
    %v823 = vpop.f32.mrf.mxu0
    %v824 = vadd.f32 %v781, %v823
    %825 = vmatmul.bf16.gmra.mxu0 %v406
    %v826 = vpop.f32.mrf.mxu0
    %v827 = vadd.f32 %v781, %v826
    %v828 = vpop.f32.mrf.mxu0
    %v829 = vadd.f32 %v781, %v828
    %830 = vdwg.mxu0
    %v831 = vperm.slane %v187, 4
    %v832 = vmul.f32 %v792, %v831
    %v833 = vmul.f32 %v794, %v831
    %v834 = vmul.f32 %v797, %v831
    %v835 = vmul.f32 %v799, %v831
    %v836 = vmul.f32 %v802, %v831
    %v837 = vmul.f32 %v804, %v831
    %v838 = vmul.f32 %v807, %v831
    %v839 = vmul.f32 %v809, %v831
    %v840 = vmul.f32 %v812, %v831
    %v841 = vmul.f32 %v814, %v831
    %v842 = vmul.f32 %v817, %v831
    %v843 = vmul.f32 %v819, %v831
    %v844 = vmul.f32 %v822, %v831
    %v845 = vmul.f32 %v824, %v831
    %v846 = vmul.f32 %v827, %v831
    %v847 = vmul.f32 %v829, %v831
    %v848 = vperm.slane %v187, 5
    %v849 = vadd.f32 %v832, %v848
    %v850 = vadd.f32 %v833, %v848
    %v851 = vadd.f32 %v834, %v848
    %v852 = vadd.f32 %v835, %v848
    %v853 = vadd.f32 %v836, %v848
    %v854 = vadd.f32 %v837, %v848
    %v855 = vadd.f32 %v838, %v848
    %v856 = vadd.f32 %v839, %v848
    %v857 = vadd.f32 %v840, %v848
    %v858 = vadd.f32 %v841, %v848
    %v859 = vadd.f32 %v842, %v848
    %v860 = vadd.f32 %v843, %v848
    %v861 = vadd.f32 %v844, %v848
    %v862 = vadd.f32 %v845, %v848
    %v863 = vadd.f32 %v846, %v848
    %v864 = vadd.f32 %v847, %v848
    %vm865 = vcmp.gt.f32.partialorder %v849, 0.0
    %vm866 = vcmp.gt.f32.partialorder %v850, 0.0
    %vm867 = vcmp.gt.f32.partialorder %v851, 0.0
    %vm868 = vcmp.gt.f32.partialorder %v852, 0.0
    %vm869 = vcmp.gt.f32.partialorder %v853, 0.0
    %vm870 = vcmp.gt.f32.partialorder %v854, 0.0
    %vm871 = vcmp.gt.f32.partialorder %v855, 0.0
    %vm872 = vcmp.gt.f32.partialorder %v856, 0.0
    %vm873 = vcmp.gt.f32.partialorder %v857, 0.0
    %vm874 = vcmp.gt.f32.partialorder %v858, 0.0
    %vm875 = vcmp.gt.f32.partialorder %v859, 0.0
    %vm876 = vcmp.gt.f32.partialorder %v860, 0.0
    %vm877 = vcmp.gt.f32.partialorder %v861, 0.0
    %vm878 = vcmp.gt.f32.partialorder %v862, 0.0
    %vm879 = vcmp.gt.f32.partialorder %v863, 0.0
    %vm880 = vcmp.gt.f32.partialorder %v864, 0.0
    %v881 = vmul.f32 %v849, 0.01
    %v882 = vmul.f32 %v850, 0.01
    %v883 = vmul.f32 %v851, 0.01
    %v884 = vmul.f32 %v852, 0.01
    %v885 = vmul.f32 %v853, 0.01
    %v886 = vmul.f32 %v854, 0.01
    %v887 = vmul.f32 %v855, 0.01
    %v888 = vmul.f32 %v856, 0.01
    %v889 = vmul.f32 %v857, 0.01
    %v890 = vmul.f32 %v858, 0.01
    %v891 = vmul.f32 %v859, 0.01
    %v892 = vmul.f32 %v860, 0.01
    %v893 = vmul.f32 %v861, 0.01
    %v894 = vmul.f32 %v862, 0.01
    %v895 = vmul.f32 %v863, 0.01
    %v896 = vmul.f32 %v864, 0.01
    %v897 = vsel %vm865, %v849, %v881
    %v898 = vsel %vm866, %v850, %v882
    %v899 = vsel %vm867, %v851, %v883
    %v900 = vsel %vm868, %v852, %v884
    %v901 = vsel %vm869, %v853, %v885
    %v902 = vsel %vm870, %v854, %v886
    %v903 = vsel %vm871, %v855, %v887
    %v904 = vsel %vm872, %v856, %v888
    %v905 = vsel %vm873, %v857, %v889
    %v906 = vsel %vm874, %v858, %v890
    %v907 = vsel %vm875, %v859, %v891
    %v908 = vsel %vm876, %v860, %v892
    %v909 = vsel %vm877, %v861, %v893
    %v910 = vsel %vm878, %v862, %v894
    %v911 = vsel %vm879, %v863, %v895
    %v912 = vsel %vm880, %v864, %v896
    %v913 = vpack.c.bf16 %v898, %v897
    %v914 = vpack.c.bf16 %v900, %v899
    %v915 = vpack.c.bf16 %v902, %v901
    %v916 = vpack.c.bf16 %v904, %v903
    %v917 = vpack.c.bf16 %v906, %v905
    %v918 = vpack.c.bf16 %v908, %v907
    %v919 = vpack.c.bf16 %v910, %v909
    %v920 = vpack.c.bf16 %v912, %v911
    %v921 = vld [vmem:[#allocation10] sm:$0xf]
    %v922 = vld [vmem:[#allocation10 + $0x4] sm:$0xf]
    %v923 = vld [vmem:[#allocation10 + $0x8] sm:$0xf]
    %v924 = vld [vmem:[#allocation10 + $0xc] sm:$0xf]
    %v925 = vld [vmem:[#allocation10 + $0x10] sm:$0xf]
    %v926 = vld [vmem:[#allocation10 + $0x14] sm:$0xf]
    %v927 = vld [vmem:[#allocation10 + $0x18] sm:$0xf]
    %v928 = vld [vmem:[#allocation10 + $0x1c] sm:$0xf]
    %v929 = vld [vmem:[#allocation10 + $0x20] sm:$0xf]
    %v930 = vld [vmem:[#allocation10 + $0x24] sm:$0xf]
    %v931 = vld [vmem:[#allocation10 + $0x28] sm:$0xf]
    %v932 = vld [vmem:[#allocation10 + $0x2c] sm:$0xf]
    %v933 = vld [vmem:[#allocation10 + $0x30] sm:$0xf]
    %v934 = vld [vmem:[#allocation10 + $0x34] sm:$0xf]
    %v935 = vld [vmem:[#allocation10 + $0x38] sm:$0xf]
    %v936 = vld [vmem:[#allocation10 + $0x3c] sm:$0xf]
    %v953 = vunpack.c.l.b16 %v921
    %v954 = vunpack.c.l.b16 %v922
    %v955 = vunpack.c.l.b16 %v923
    %v956 = vunpack.c.l.b16 %v924
    %v957 = vunpack.c.l.b16 %v925
    %v958 = vunpack.c.l.b16 %v926
    %v959 = vunpack.c.l.b16 %v927
    %v960 = vunpack.c.l.b16 %v928
    %v961 = vunpack.c.l.b16 %v929
    %v962 = vunpack.c.l.b16 %v930
    %v963 = vunpack.c.l.b16 %v931
    %v964 = vunpack.c.l.b16 %v932
    %v965 = vunpack.c.l.b16 %v933
    %v966 = vunpack.c.l.b16 %v934
    %v967 = vunpack.c.l.b16 %v935
    %v968 = vunpack.c.l.b16 %v936
    %v969 = vpack.c.b16 %v954, %v953
    %v970 = vpack.c.b16 %v956, %v955
    %v971 = vpack.c.b16 %v958, %v957
    %v972 = vpack.c.b16 %v960, %v959
    %v973 = vpack.c.b16 %v962, %v961
    %v974 = vpack.c.b16 %v964, %v963
    %v975 = vpack.c.b16 %v966, %v965
    %v976 = vpack.c.b16 %v968, %v967
    %985 = vmatpush.bf16.msra.mxu0 %v976
    %986 = vmatpush.bf16.msra.mxu0 %v975
    %987 = vmatpush.bf16.msra.mxu0 %v974
    %988 = vmatpush.bf16.msra.mxu0 %v973
    %989 = vmatpush.bf16.msra.mxu0 %v972
    %990 = vmatpush.bf16.msra.mxu0 %v971
    %991 = vmatpush.bf16.msra.mxu0 %v970
    %992 = vmatpush.bf16.msra.mxu0 %v969
    %993 = vmatmul.bf16.gmra.mxu0 %v913
    %v994 = vpop.f32.mrf.mxu0
    %v995 = vadd.f32 0.0, %v994
    %v996 = vpop.f32.mrf.mxu0
    %v997 = vadd.f32 0.0, %v996
    %998 = vmatmul.bf16.gmra.mxu0 %v914
    %v999 = vpop.f32.mrf.mxu0
    %v1000 = vadd.f32 0.0, %v999
    %v1001 = vpop.f32.mrf.mxu0
    %v1002 = vadd.f32 0.0, %v1001
    %1003 = vmatmul.bf16.gmra.mxu0 %v915
    %v1004 = vpop.f32.mrf.mxu0
    %v1005 = vadd.f32 0.0, %v1004
    %v1006 = vpop.f32.mrf.mxu0
    %v1007 = vadd.f32 0.0, %v1006
    %1008 = vmatmul.bf16.gmra.mxu0 %v916
    %v1009 = vpop.f32.mrf.mxu0
    %v1010 = vadd.f32 0.0, %v1009
    %v1011 = vpop.f32.mrf.mxu0
    %v1012 = vadd.f32 0.0, %v1011
    %1013 = vmatmul.bf16.gmra.mxu0 %v917
    %v1014 = vpop.f32.mrf.mxu0
    %v1015 = vadd.f32 0.0, %v1014
    %v1016 = vpop.f32.mrf.mxu0
    %v1017 = vadd.f32 0.0, %v1016
    %1018 = vmatmul.bf16.gmra.mxu0 %v918
    %v1019 = vpop.f32.mrf.mxu0
    %v1020 = vadd.f32 0.0, %v1019
    %v1021 = vpop.f32.mrf.mxu0
    %v1022 = vadd.f32 0.0, %v1021
    %1023 = vmatmul.bf16.gmra.mxu0 %v919
    %v1024 = vpop.f32.mrf.mxu0
    %v1025 = vadd.f32 0.0, %v1024
    %v1026 = vpop.f32.mrf.mxu0
    %v1027 = vadd.f32 0.0, %v1026
    %1028 = vmatmul.bf16.gmra.mxu0 %v920
    %v1029 = vpop.f32.mrf.mxu0
    %v1030 = vadd.f32 0.0, %v1029
    %v1031 = vpop.f32.mrf.mxu0
    %v1032 = vadd.f32 0.0, %v1031
    %1033 = vdwg.mxu0
    %v1034 = vpack.c.bf16 %v997, %v995
    %v1035 = vpack.c.bf16 %v1002, %v1000
    %v1036 = vpack.c.bf16 %v1007, %v1005
    %v1037 = vpack.c.bf16 %v1012, %v1010
    %v1038 = vpack.c.bf16 %v1017, %v1015
    %v1039 = vpack.c.bf16 %v1022, %v1020
    %v1040 = vpack.c.bf16 %v1027, %v1025
    %v1041 = vpack.c.bf16 %v1032, %v1030
    %v1042 = vperm.slane %v187, 6
    %1043 = vmatpush.bf16.msra.mxu0 %v1041
    %1044 = vmatpush.bf16.msra.mxu0 %v1040
    %1045 = vmatpush.bf16.msra.mxu0 %v1039
    %1046 = vmatpush.bf16.msra.mxu0 %v1038
    %1047 = vmatpush.bf16.msra.mxu0 %v1037
    %1048 = vmatpush.bf16.msra.mxu0 %v1036
    %1049 = vmatpush.bf16.msra.mxu0 %v1035
    %1050 = vmatpush.bf16.msra.mxu0 %v1034
    %1051 = vmatmul.bf16.gmra.mxu0 %v399
    %v1052 = vpop.f32.mrf.mxu0
    %v1053 = vadd.f32 %v1042, %v1052
    %v1054 = vpop.f32.mrf.mxu0
    %v1055 = vadd.f32 %v1042, %v1054
    %1056 = vmatmul.bf16.gmra.mxu0 %v400
    %v1057 = vpop.f32.mrf.mxu0
    %v1058 = vadd.f32 %v1042, %v1057
    %v1059 = vpop.f32.mrf.mxu0
    %v1060 = vadd.f32 %v1042, %v1059
    %1061 = vmatmul.bf16.gmra.mxu0 %v401
    %v1062 = vpop.f32.mrf.mxu0
    %v1063 = vadd.f32 %v1042, %v1062
    %v1064 = vpop.f32.mrf.mxu0
    %v1065 = vadd.f32 %v1042, %v1064
    %1066 = vmatmul.bf16.gmra.mxu0 %v402
    %v1067 = vpop.f32.mrf.mxu0
    %v1068 = vadd.f32 %v1042, %v1067
    %v1069 = vpop.f32.mrf.mxu0
    %v1070 = vadd.f32 %v1042, %v1069
    %1071 = vmatmul.bf16.gmra.mxu0 %v403
    %v1072 = vpop.f32.mrf.mxu0
    %v1073 = vadd.f32 %v1042, %v1072
    %v1074 = vpop.f32.mrf.mxu0
    %v1075 = vadd.f32 %v1042, %v1074
    %1076 = vmatmul.bf16.gmra.mxu0 %v404
    %v1077 = vpop.f32.mrf.mxu0
    %v1078 = vadd.f32 %v1042, %v1077
    %v1079 = vpop.f32.mrf.mxu0
    %v1080 = vadd.f32 %v1042, %v1079
    %1081 = vmatmul.bf16.gmra.mxu0 %v405
    %v1082 = vpop.f32.mrf.mxu0
    %v1083 = vadd.f32 %v1042, %v1082
    %v1084 = vpop.f32.mrf.mxu0
    %v1085 = vadd.f32 %v1042, %v1084
    %1086 = vmatmul.bf16.gmra.mxu0 %v406
    %v1087 = vpop.f32.mrf.mxu0
    %v1088 = vadd.f32 %v1042, %v1087
    %v1089 = vpop.f32.mrf.mxu0
    %v1090 = vadd.f32 %v1042, %v1089
    %1091 = vdwg.mxu0
    %v1092 = vperm.slane %v187, 7
    %v1093 = vmul.f32 %v1053, %v1092
    %v1094 = vmul.f32 %v1055, %v1092
    %v1095 = vmul.f32 %v1058, %v1092
    %v1096 = vmul.f32 %v1060, %v1092
    %v1097 = vmul.f32 %v1063, %v1092
    %v1098 = vmul.f32 %v1065, %v1092
    %v1099 = vmul.f32 %v1068, %v1092
    %v1100 = vmul.f32 %v1070, %v1092
    %v1101 = vmul.f32 %v1073, %v1092
    %v1102 = vmul.f32 %v1075, %v1092
    %v1103 = vmul.f32 %v1078, %v1092
    %v1104 = vmul.f32 %v1080, %v1092
    %v1105 = vmul.f32 %v1083, %v1092
    %v1106 = vmul.f32 %v1085, %v1092
    %v1107 = vmul.f32 %v1088, %v1092
    %v1108 = vmul.f32 %v1090, %v1092
    %v1109 = vperm.slane %v188, 0
    %v1110 = vadd.f32 %v1093, %v1109
    %v1111 = vadd.f32 %v1094, %v1109
    %v1112 = vadd.f32 %v1095, %v1109
    %v1113 = vadd.f32 %v1096, %v1109
    %v1114 = vadd.f32 %v1097, %v1109
    %v1115 = vadd.f32 %v1098, %v1109
    %v1116 = vadd.f32 %v1099, %v1109
    %v1117 = vadd.f32 %v1100, %v1109
    %v1118 = vadd.f32 %v1101, %v1109
    %v1119 = vadd.f32 %v1102, %v1109
    %v1120 = vadd.f32 %v1103, %v1109
    %v1121 = vadd.f32 %v1104, %v1109
    %v1122 = vadd.f32 %v1105, %v1109
    %v1123 = vadd.f32 %v1106, %v1109
    %v1124 = vadd.f32 %v1107, %v1109
    %v1125 = vadd.f32 %v1108, %v1109
    %vm1126 = vcmp.gt.f32.partialorder %v1110, 0.0
    %vm1127 = vcmp.gt.f32.partialorder %v1111, 0.0
    %vm1128 = vcmp.gt.f32.partialorder %v1112, 0.0
    %vm1129 = vcmp.gt.f32.partialorder %v1113, 0.0
    %vm1130 = vcmp.gt.f32.partialorder %v1114, 0.0
    %vm1131 = vcmp.gt.f32.partialorder %v1115, 0.0
    %vm1132 = vcmp.gt.f32.partialorder %v1116, 0.0
    %vm1133 = vcmp.gt.f32.partialorder %v1117, 0.0
    %vm1134 = vcmp.gt.f32.partialorder %v1118, 0.0
    %vm1135 = vcmp.gt.f32.partialorder %v1119, 0.0
    %vm1136 = vcmp.gt.f32.partialorder %v1120, 0.0
    %vm1137 = vcmp.gt.f32.partialorder %v1121, 0.0
    %vm1138 = vcmp.gt.f32.partialorder %v1122, 0.0
    %vm1139 = vcmp.gt.f32.partialorder %v1123, 0.0
    %vm1140 = vcmp.gt.f32.partialorder %v1124, 0.0
    %vm1141 = vcmp.gt.f32.partialorder %v1125, 0.0
    %v1142 = vmul.f32 %v1110, 0.01
    %v1143 = vmul.f32 %v1111, 0.01
    %v1144 = vmul.f32 %v1112, 0.01
    %v1145 = vmul.f32 %v1113, 0.01
    %v1146 = vmul.f32 %v1114, 0.01
    %v1147 = vmul.f32 %v1115, 0.01
    %v1148 = vmul.f32 %v1116, 0.01
    %v1149 = vmul.f32 %v1117, 0.01
    %v1150 = vmul.f32 %v1118, 0.01
    %v1151 = vmul.f32 %v1119, 0.01
    %v1152 = vmul.f32 %v1120, 0.01
    %v1153 = vmul.f32 %v1121, 0.01
    %v1154 = vmul.f32 %v1122, 0.01
    %v1155 = vmul.f32 %v1123, 0.01
    %v1156 = vmul.f32 %v1124, 0.01
    %v1157 = vmul.f32 %v1125, 0.01
    %v1158 = vsel %vm1126, %v1110, %v1142
    %v1159 = vsel %vm1127, %v1111, %v1143
    %v1160 = vsel %vm1128, %v1112, %v1144
    %v1161 = vsel %vm1129, %v1113, %v1145
    %v1162 = vsel %vm1130, %v1114, %v1146
    %v1163 = vsel %vm1131, %v1115, %v1147
    %v1164 = vsel %vm1132, %v1116, %v1148
    %v1165 = vsel %vm1133, %v1117, %v1149
    %v1166 = vsel %vm1134, %v1118, %v1150
    %v1167 = vsel %vm1135, %v1119, %v1151
    %v1168 = vsel %vm1136, %v1120, %v1152
    %v1169 = vsel %vm1137, %v1121, %v1153
    %v1170 = vsel %vm1138, %v1122, %v1154
    %v1171 = vsel %vm1139, %v1123, %v1155
    %v1172 = vsel %vm1140, %v1124, %v1156
    %v1173 = vsel %vm1141, %v1125, %v1157
    %v1174 = vpack.c.bf16 %v1159, %v1158
    %v1175 = vpack.c.bf16 %v1161, %v1160
    %v1176 = vpack.c.bf16 %v1163, %v1162
    %v1177 = vpack.c.bf16 %v1165, %v1164
    %v1178 = vpack.c.bf16 %v1167, %v1166
    %v1179 = vpack.c.bf16 %v1169, %v1168
    %v1180 = vpack.c.bf16 %v1171, %v1170
    %v1181 = vpack.c.bf16 %v1173, %v1172
    %v1182 = vld [vmem:[#allocation11] sm:$0xf]
    %v1183 = vld [vmem:[#allocation11 + $0x4] sm:$0xf]
    %v1184 = vld [vmem:[#allocation11 + $0x8] sm:$0xf]
    %v1185 = vld [vmem:[#allocation11 + $0xc] sm:$0xf]
    %v1186 = vld [vmem:[#allocation11 + $0x10] sm:$0xf]
    %v1187 = vld [vmem:[#allocation11 + $0x14] sm:$0xf]
    %v1188 = vld [vmem:[#allocation11 + $0x18] sm:$0xf]
    %v1189 = vld [vmem:[#allocation11 + $0x1c] sm:$0xf]
    %v1190 = vld [vmem:[#allocation11 + $0x20] sm:$0xf]
    %v1191 = vld [vmem:[#allocation11 + $0x24] sm:$0xf]
    %v1192 = vld [vmem:[#allocation11 + $0x28] sm:$0xf]
    %v1193 = vld [vmem:[#allocation11 + $0x2c] sm:$0xf]
    %v1194 = vld [vmem:[#allocation11 + $0x30] sm:$0xf]
    %v1195 = vld [vmem:[#allocation11 + $0x34] sm:$0xf]
    %v1196 = vld [vmem:[#allocation11 + $0x38] sm:$0xf]
    %v1197 = vld [vmem:[#allocation11 + $0x3c] sm:$0xf]
    %v1214 = vunpack.c.l.b16 %v1182
    %v1215 = vunpack.c.l.b16 %v1183
    %v1216 = vunpack.c.l.b16 %v1184
    %v1217 = vunpack.c.l.b16 %v1185
    %v1218 = vunpack.c.l.b16 %v1186
    %v1219 = vunpack.c.l.b16 %v1187
    %v1220 = vunpack.c.l.b16 %v1188
    %v1221 = vunpack.c.l.b16 %v1189
    %v1222 = vunpack.c.l.b16 %v1190
    %v1223 = vunpack.c.l.b16 %v1191
    %v1224 = vunpack.c.l.b16 %v1192
    %v1225 = vunpack.c.l.b16 %v1193
    %v1226 = vunpack.c.l.b16 %v1194
    %v1227 = vunpack.c.l.b16 %v1195
    %v1228 = vunpack.c.l.b16 %v1196
    %v1229 = vunpack.c.l.b16 %v1197
    %v1230 = vpack.c.b16 %v1215, %v1214
    %v1231 = vpack.c.b16 %v1217, %v1216
    %v1232 = vpack.c.b16 %v1219, %v1218
    %v1233 = vpack.c.b16 %v1221, %v1220
    %v1234 = vpack.c.b16 %v1223, %v1222
    %v1235 = vpack.c.b16 %v1225, %v1224
    %v1236 = vpack.c.b16 %v1227, %v1226
    %v1237 = vpack.c.b16 %v1229, %v1228
    %1246 = vmatpush.bf16.msra.mxu0 %v1237
    %1247 = vmatpush.bf16.msra.mxu0 %v1236
    %1248 = vmatpush.bf16.msra.mxu0 %v1235
    %1249 = vmatpush.bf16.msra.mxu0 %v1234
    %1250 = vmatpush.bf16.msra.mxu0 %v1233
    %1251 = vmatpush.bf16.msra.mxu0 %v1232
    %1252 = vmatpush.bf16.msra.mxu0 %v1231
    %1253 = vmatpush.bf16.msra.mxu0 %v1230
    %1254 = vmatmul.bf16.gmra.mxu0 %v1174
    %v1255 = vpop.f32.mrf.mxu0
    %v1256 = vadd.f32 0.0, %v1255
    %v1257 = vpop.f32.mrf.mxu0
    %v1258 = vadd.f32 0.0, %v1257
    %1259 = vmatmul.bf16.gmra.mxu0 %v1175
    %v1260 = vpop.f32.mrf.mxu0
    %v1261 = vadd.f32 0.0, %v1260
    %v1262 = vpop.f32.mrf.mxu0
    %v1263 = vadd.f32 0.0, %v1262
    %1264 = vmatmul.bf16.gmra.mxu0 %v1176
    %v1265 = vpop.f32.mrf.mxu0
    %v1266 = vadd.f32 0.0, %v1265
    %v1267 = vpop.f32.mrf.mxu0
    %v1268 = vadd.f32 0.0, %v1267
    %1269 = vmatmul.bf16.gmra.mxu0 %v1177
    %v1270 = vpop.f32.mrf.mxu0
    %v1271 = vadd.f32 0.0, %v1270
    %v1272 = vpop.f32.mrf.mxu0
    %v1273 = vadd.f32 0.0, %v1272
    %1274 = vmatmul.bf16.gmra.mxu0 %v1178
    %v1275 = vpop.f32.mrf.mxu0
    %v1276 = vadd.f32 0.0, %v1275
    %v1277 = vpop.f32.mrf.mxu0
    %v1278 = vadd.f32 0.0, %v1277
    %1279 = vmatmul.bf16.gmra.mxu0 %v1179
    %v1280 = vpop.f32.mrf.mxu0
    %v1281 = vadd.f32 0.0, %v1280
    %v1282 = vpop.f32.mrf.mxu0
    %v1283 = vadd.f32 0.0, %v1282
    %1284 = vmatmul.bf16.gmra.mxu0 %v1180
    %v1285 = vpop.f32.mrf.mxu0
    %v1286 = vadd.f32 0.0, %v1285
    %v1287 = vpop.f32.mrf.mxu0
    %v1288 = vadd.f32 0.0, %v1287
    %1289 = vmatmul.bf16.gmra.mxu0 %v1181
    %v1290 = vpop.f32.mrf.mxu0
    %v1291 = vadd.f32 0.0, %v1290
    %v1292 = vpop.f32.mrf.mxu0
    %v1293 = vadd.f32 0.0, %v1292
    %1294 = vdwg.mxu0
    %v1295 = vpack.c.bf16 %v1258, %v1256
    %v1296 = vpack.c.bf16 %v1263, %v1261
    %v1297 = vpack.c.bf16 %v1268, %v1266
    %v1298 = vpack.c.bf16 %v1273, %v1271
    %v1299 = vpack.c.bf16 %v1278, %v1276
    %v1300 = vpack.c.bf16 %v1283, %v1281
    %v1301 = vpack.c.bf16 %v1288, %v1286
    %v1302 = vpack.c.bf16 %v1293, %v1291
    %v1303 = vperm.slane %v188, 1
    %1304 = vmatpush.bf16.msra.mxu0 %v1302
    %1305 = vmatpush.bf16.msra.mxu0 %v1301
    %1306 = vmatpush.bf16.msra.mxu0 %v1300
    %1307 = vmatpush.bf16.msra.mxu0 %v1299
    %1308 = vmatpush.bf16.msra.mxu0 %v1298
    %1309 = vmatpush.bf16.msra.mxu0 %v1297
    %1310 = vmatpush.bf16.msra.mxu0 %v1296
    %1311 = vmatpush.bf16.msra.mxu0 %v1295
    %1312 = vmatmul.bf16.gmra.mxu0 %v399
    %v1313 = vpop.f32.mrf.mxu0
    %v1314 = vadd.f32 %v1303, %v1313
    %v1315 = vpop.f32.mrf.mxu0
    %v1316 = vadd.f32 %v1303, %v1315
    %1317 = vmatmul.bf16.gmra.mxu0 %v400
    %v1318 = vpop.f32.mrf.mxu0
    %v1319 = vadd.f32 %v1303, %v1318
    %v1320 = vpop.f32.mrf.mxu0
    %v1321 = vadd.f32 %v1303, %v1320
    %1322 = vmatmul.bf16.gmra.mxu0 %v401
    %v1323 = vpop.f32.mrf.mxu0
    %v1324 = vadd.f32 %v1303, %v1323
    %v1325 = vpop.f32.mrf.mxu0
    %v1326 = vadd.f32 %v1303, %v1325
    %1327 = vmatmul.bf16.gmra.mxu0 %v402
    %v1328 = vpop.f32.mrf.mxu0
    %v1329 = vadd.f32 %v1303, %v1328
    %v1330 = vpop.f32.mrf.mxu0
    %v1331 = vadd.f32 %v1303, %v1330
    %1332 = vmatmul.bf16.gmra.mxu0 %v403
    %v1333 = vpop.f32.mrf.mxu0
    %v1334 = vadd.f32 %v1303, %v1333
    %v1335 = vpop.f32.mrf.mxu0
    %v1336 = vadd.f32 %v1303, %v1335
    %1337 = vmatmul.bf16.gmra.mxu0 %v404
    %v1338 = vpop.f32.mrf.mxu0
    %v1339 = vadd.f32 %v1303, %v1338
    %v1340 = vpop.f32.mrf.mxu0
    %v1341 = vadd.f32 %v1303, %v1340
    %1342 = vmatmul.bf16.gmra.mxu0 %v405
    %v1343 = vpop.f32.mrf.mxu0
    %v1344 = vadd.f32 %v1303, %v1343
    %v1345 = vpop.f32.mrf.mxu0
    %v1346 = vadd.f32 %v1303, %v1345
    %1347 = vmatmul.bf16.gmra.mxu0 %v406
    %v1348 = vpop.f32.mrf.mxu0
    %v1349 = vadd.f32 %v1303, %v1348
    %v1350 = vpop.f32.mrf.mxu0
    %v1351 = vadd.f32 %v1303, %v1350
    %1352 = vdwg.mxu0
    %v1353 = vadd.f32 %v1314, %v312
    %v1354 = vadd.f32 %v1316, %v314
    %v1355 = vadd.f32 %v1319, %v317
    %v1356 = vadd.f32 %v1321, %v319
    %v1357 = vadd.f32 %v1324, %v322
    %v1358 = vadd.f32 %v1326, %v324
    %v1359 = vadd.f32 %v1329, %v327
    %v1360 = vadd.f32 %v1331, %v329
    %v1361 = vadd.f32 %v1334, %v332
    %v1362 = vadd.f32 %v1336, %v334
    %v1363 = vadd.f32 %v1339, %v337
    %v1364 = vadd.f32 %v1341, %v339
    %v1365 = vadd.f32 %v1344, %v342
    %v1366 = vadd.f32 %v1346, %v344
    %v1367 = vadd.f32 %v1349, %v347
    %v1368 = vadd.f32 %v1351, %v349
    %v1369 = vperm.slane %v188, 2
    %v1370 = vmul.f32 %v1353, %v1369
    %v1371 = vmul.f32 %v1354, %v1369
    %v1372 = vmul.f32 %v1355, %v1369
    %v1373 = vmul.f32 %v1356, %v1369
    %v1374 = vmul.f32 %v1357, %v1369
    %v1375 = vmul.f32 %v1358, %v1369
    %v1376 = vmul.f32 %v1359, %v1369
    %v1377 = vmul.f32 %v1360, %v1369
    %v1378 = vmul.f32 %v1361, %v1369
    %v1379 = vmul.f32 %v1362, %v1369
    %v1380 = vmul.f32 %v1363, %v1369
    %v1381 = vmul.f32 %v1364, %v1369
    %v1382 = vmul.f32 %v1365, %v1369
    %v1383 = vmul.f32 %v1366, %v1369
    %v1384 = vmul.f32 %v1367, %v1369
    %v1385 = vmul.f32 %v1368, %v1369
    %v1386 = vperm.slane %v188, 3
    %v1387 = vadd.f32 %v1370, %v1386
    %v1388 = vadd.f32 %v1371, %v1386
    %v1389 = vadd.f32 %v1372, %v1386
    %v1390 = vadd.f32 %v1373, %v1386
    %v1391 = vadd.f32 %v1374, %v1386
    %v1392 = vadd.f32 %v1375, %v1386
    %v1393 = vadd.f32 %v1376, %v1386
    %v1394 = vadd.f32 %v1377, %v1386
    %v1395 = vadd.f32 %v1378, %v1386
    %v1396 = vadd.f32 %v1379, %v1386
    %v1397 = vadd.f32 %v1380, %v1386
    %v1398 = vadd.f32 %v1381, %v1386
    %v1399 = vadd.f32 %v1382, %v1386
    %v1400 = vadd.f32 %v1383, %v1386
    %v1401 = vadd.f32 %v1384, %v1386
    %v1402 = vadd.f32 %v1385, %v1386
    %1403 = vadd.xlane.f32.xlu0 %v1387
    %v1404 = vpop.xlane.xlu0 %1403
    %1405 = vadd.xlane.f32.xlu0 %v1388
    %v1406 = vpop.xlane.xlu0 %1405
    %1407 = vadd.xlane.f32.xlu0 %v1389
    %v1408 = vpop.xlane.xlu0 %1407
    %1409 = vadd.xlane.f32.xlu0 %v1390
    %v1410 = vpop.xlane.xlu0 %1409
    %1411 = vadd.xlane.f32.xlu0 %v1391
    %v1412 = vpop.xlane.xlu0 %1411
    %1413 = vadd.xlane.f32.xlu0 %v1392
    %v1414 = vpop.xlane.xlu0 %1413
    %1415 = vadd.xlane.f32.xlu0 %v1393
    %v1416 = vpop.xlane.xlu0 %1415
    %1417 = vadd.xlane.f32.xlu0 %v1394
    %v1418 = vpop.xlane.xlu0 %1417
    %1419 = vadd.xlane.f32.xlu0 %v1395
    %v1420 = vpop.xlane.xlu0 %1419
    %1421 = vadd.xlane.f32.xlu0 %v1396
    %v1422 = vpop.xlane.xlu0 %1421
    %1423 = vadd.xlane.f32.xlu0 %v1397
    %v1424 = vpop.xlane.xlu0 %1423
    %1425 = vadd.xlane.f32.xlu0 %v1398
    %v1426 = vpop.xlane.xlu0 %1425
    %1427 = vadd.xlane.f32.xlu0 %v1399
    %v1428 = vpop.xlane.xlu0 %1427
    %1429 = vadd.xlane.f32.xlu0 %v1400
    %v1430 = vpop.xlane.xlu0 %1429
    %1431 = vadd.xlane.f32.xlu0 %v1401
    %v1432 = vpop.xlane.xlu0 %1431
    %1433 = vadd.xlane.f32.xlu0 %v1402
    %v1434 = vpop.xlane.xlu0 %1433
    %v1435 = vmul.f32 %v1404, 0.0625
    %v1436 = vmul.f32 %v1406, 0.0625
    %v1437 = vmul.f32 %v1408, 0.0625
    %v1438 = vmul.f32 %v1410, 0.0625
    %v1439 = vmul.f32 %v1412, 0.0625
    %v1440 = vmul.f32 %v1414, 0.0625
    %v1441 = vmul.f32 %v1416, 0.0625
    %v1442 = vmul.f32 %v1418, 0.0625
    %v1443 = vmul.f32 %v1420, 0.0625
    %v1444 = vmul.f32 %v1422, 0.0625
    %v1445 = vmul.f32 %v1424, 0.0625
    %v1446 = vmul.f32 %v1426, 0.0625
    %v1447 = vmul.f32 %v1428, 0.0625
    %v1448 = vmul.f32 %v1430, 0.0625
    %v1449 = vmul.f32 %v1432, 0.0625
    %v1450 = vmul.f32 %v1434, 0.0625
    %v1451 = vmul.f32 %v1387, %v1387
    %v1452 = vmul.f32 %v1388, %v1388
    %v1453 = vmul.f32 %v1389, %v1389
    %v1454 = vmul.f32 %v1390, %v1390
    %v1455 = vmul.f32 %v1391, %v1391
    %v1456 = vmul.f32 %v1392, %v1392
    %v1457 = vmul.f32 %v1393, %v1393
    %v1458 = vmul.f32 %v1394, %v1394
    %v1459 = vmul.f32 %v1395, %v1395
    %v1460 = vmul.f32 %v1396, %v1396
    %v1461 = vmul.f32 %v1397, %v1397
    %v1462 = vmul.f32 %v1398, %v1398
    %v1463 = vmul.f32 %v1399, %v1399
    %v1464 = vmul.f32 %v1400, %v1400
    %v1465 = vmul.f32 %v1401, %v1401
    %v1466 = vmul.f32 %v1402, %v1402
    %1467 = vadd.xlane.f32.xlu0 %v1451
    %v1468 = vpop.xlane.xlu0 %1467
    %1469 = vadd.xlane.f32.xlu0 %v1452
    %v1470 = vpop.xlane.xlu0 %1469
    %1471 = vadd.xlane.f32.xlu0 %v1453
    %v1472 = vpop.xlane.xlu0 %1471
    %1473 = vadd.xlane.f32.xlu0 %v1454
    %v1474 = vpop.xlane.xlu0 %1473
    %1475 = vadd.xlane.f32.xlu0 %v1455
    %v1476 = vpop.xlane.xlu0 %1475
    %1477 = vadd.xlane.f32.xlu0 %v1456
    %v1478 = vpop.xlane.xlu0 %1477
    %1479 = vadd.xlane.f32.xlu0 %v1457
    %v1480 = vpop.xlane.xlu0 %1479
    %1481 = vadd.xlane.f32.xlu0 %v1458
    %v1482 = vpop.xlane.xlu0 %1481
    %1483 = vadd.xlane.f32.xlu0 %v1459
    %v1484 = vpop.xlane.xlu0 %1483
    %1485 = vadd.xlane.f32.xlu0 %v1460
    %v1486 = vpop.xlane.xlu0 %1485
    %1487 = vadd.xlane.f32.xlu0 %v1461
    %v1488 = vpop.xlane.xlu0 %1487
    %1489 = vadd.xlane.f32.xlu0 %v1462
    %v1490 = vpop.xlane.xlu0 %1489
    %1491 = vadd.xlane.f32.xlu0 %v1463
    %v1492 = vpop.xlane.xlu0 %1491
    %1493 = vadd.xlane.f32.xlu0 %v1464
    %v1494 = vpop.xlane.xlu0 %1493
    %1495 = vadd.xlane.f32.xlu0 %v1465
    %v1496 = vpop.xlane.xlu0 %1495
    %1497 = vadd.xlane.f32.xlu0 %v1466
    %v1498 = vpop.xlane.xlu0 %1497
    %v1499 = vmul.f32 %v1468, 0.0625
    %v1500 = vmul.f32 %v1470, 0.0625
    %v1501 = vmul.f32 %v1472, 0.0625
    %v1502 = vmul.f32 %v1474, 0.0625
    %v1503 = vmul.f32 %v1476, 0.0625
    %v1504 = vmul.f32 %v1478, 0.0625
    %v1505 = vmul.f32 %v1480, 0.0625
    %v1506 = vmul.f32 %v1482, 0.0625
    %v1507 = vmul.f32 %v1484, 0.0625
    %v1508 = vmul.f32 %v1486, 0.0625
    %v1509 = vmul.f32 %v1488, 0.0625
    %v1510 = vmul.f32 %v1490, 0.0625
    %v1511 = vmul.f32 %v1492, 0.0625
    %v1512 = vmul.f32 %v1494, 0.0625
    %v1513 = vmul.f32 %v1496, 0.0625
    %v1514 = vmul.f32 %v1498, 0.0625
    %v1515 = vmul.f32 %v1435, %v1435
    %v1516 = vmul.f32 %v1436, %v1436
    %v1517 = vmul.f32 %v1437, %v1437
    %v1518 = vmul.f32 %v1438, %v1438
    %v1519 = vmul.f32 %v1439, %v1439
    %v1520 = vmul.f32 %v1440, %v1440
    %v1521 = vmul.f32 %v1441, %v1441
    %v1522 = vmul.f32 %v1442, %v1442
    %v1523 = vmul.f32 %v1443, %v1443
    %v1524 = vmul.f32 %v1444, %v1444
    %v1525 = vmul.f32 %v1445, %v1445
    %v1526 = vmul.f32 %v1446, %v1446
    %v1527 = vmul.f32 %v1447, %v1447
    %v1528 = vmul.f32 %v1448, %v1448
    %v1529 = vmul.f32 %v1449, %v1449
    %v1530 = vmul.f32 %v1450, %v1450
    %v1531 = vsub.f32 %v1499, %v1515
    %v1532 = vsub.f32 %v1500, %v1516
    %v1533 = vsub.f32 %v1501, %v1517
    %v1534 = vsub.f32 %v1502, %v1518
    %v1535 = vsub.f32 %v1503, %v1519
    %v1536 = vsub.f32 %v1504, %v1520
    %v1537 = vsub.f32 %v1505, %v1521
    %v1538 = vsub.f32 %v1506, %v1522
    %v1539 = vsub.f32 %v1507, %v1523
    %v1540 = vsub.f32 %v1508, %v1524
    %v1541 = vsub.f32 %v1509, %v1525
    %v1542 = vsub.f32 %v1510, %v1526
    %v1543 = vsub.f32 %v1511, %v1527
    %v1544 = vsub.f32 %v1512, %v1528
    %v1545 = vsub.f32 %v1513, %v1529
    %v1546 = vsub.f32 %v1514, %v1530
    %v1547 = vsub.f32 %v1387, %v1435
    %v1548 = vsub.f32 %v1388, %v1436
    %v1549 = vsub.f32 %v1389, %v1437
    %v1550 = vsub.f32 %v1390, %v1438
    %v1551 = vsub.f32 %v1391, %v1439
    %v1552 = vsub.f32 %v1392, %v1440
    %v1553 = vsub.f32 %v1393, %v1441
    %v1554 = vsub.f32 %v1394, %v1442
    %v1555 = vsub.f32 %v1395, %v1443
    %v1556 = vsub.f32 %v1396, %v1444
    %v1557 = vsub.f32 %v1397, %v1445
    %v1558 = vsub.f32 %v1398, %v1446
    %v1559 = vsub.f32 %v1399, %v1447
    %v1560 = vsub.f32 %v1400, %v1448
    %v1561 = vsub.f32 %v1401, %v1449
    %v1562 = vsub.f32 %v1402, %v1450
    %v1563 = vadd.f32 %v1531, 1e-05
    %v1564 = vadd.f32 %v1532, 1e-05
    %v1565 = vadd.f32 %v1533, 1e-05
    %v1566 = vadd.f32 %v1534, 1e-05
    %v1567 = vadd.f32 %v1535, 1e-05
    %v1568 = vadd.f32 %v1536, 1e-05
    %v1569 = vadd.f32 %v1537, 1e-05
    %v1570 = vadd.f32 %v1538, 1e-05
    %v1571 = vadd.f32 %v1539, 1e-05
    %v1572 = vadd.f32 %v1540, 1e-05
    %v1573 = vadd.f32 %v1541, 1e-05
    %v1574 = vadd.f32 %v1542, 1e-05
    %v1575 = vadd.f32 %v1543, 1e-05
    %v1576 = vadd.f32 %v1544, 1e-05
    %v1577 = vadd.f32 %v1545, 1e-05
    %v1578 = vadd.f32 %v1546, 1e-05
    %v1579 = vrsqrt.pop %v1563
    %v1580 = vmul.f32 %v1579, %v1563
    %v1581 = vmul.f32 %v1580, %v1579
    %v1582 = vmul.f32 0.5, %v1581
    %v1583 = vsub.f32 1.5, %v1582
    %v1584 = vmul.f32 %v1579, %v1583
    %vm1585 = vweird.f32 %v1563
    %vm1586 = vweird.f32 %v1579
    %vm1587 = vmor %vm1585, %vm1586
    %v1588 = vsel %vm1587, %v1579, %v1584
    %v1589 = vrsqrt.pop %v1564
    %v1590 = vmul.f32 %v1589, %v1564
    %v1591 = vmul.f32 %v1590, %v1589
    %v1592 = vmul.f32 0.5, %v1591
    %v1593 = vsub.f32 1.5, %v1592
    %v1594 = vmul.f32 %v1589, %v1593
    %vm1595 = vweird.f32 %v1564
    %vm1596 = vweird.f32 %v1589
    %vm1597 = vmor %vm1595, %vm1596
    %v1598 = vsel %vm1597, %v1589, %v1594
    %v1599 = vrsqrt.pop %v1565
    %v1600 = vmul.f32 %v1599, %v1565
    %v1601 = vmul.f32 %v1600, %v1599
    %v1602 = vmul.f32 0.5, %v1601
    %v1603 = vsub.f32 1.5, %v1602
    %v1604 = vmul.f32 %v1599, %v1603
    %vm1605 = vweird.f32 %v1565
    %vm1606 = vweird.f32 %v1599
    %vm1607 = vmor %vm1605, %vm1606
    %v1608 = vsel %vm1607, %v1599, %v1604
    %v1609 = vrsqrt.pop %v1566
    %v1610 = vmul.f32 %v1609, %v1566
    %v1611 = vmul.f32 %v1610, %v1609
    %v1612 = vmul.f32 0.5, %v1611
    %v1613 = vsub.f32 1.5, %v1612
    %v1614 = vmul.f32 %v1609, %v1613
    %vm1615 = vweird.f32 %v1566
    %vm1616 = vweird.f32 %v1609
    %vm1617 = vmor %vm1615, %vm1616
    %v1618 = vsel %vm1617, %v1609, %v1614
    %v1619 = vrsqrt.pop %v1567
    %v1620 = vmul.f32 %v1619, %v1567
    %v1621 = vmul.f32 %v1620, %v1619
    %v1622 = vmul.f32 0.5, %v1621
    %v1623 = vsub.f32 1.5, %v1622
    %v1624 = vmul.f32 %v1619, %v1623
    %vm1625 = vweird.f32 %v1567
    %vm1626 = vweird.f32 %v1619
    %vm1627 = vmor %vm1625, %vm1626
    %v1628 = vsel %vm1627, %v1619, %v1624
    %v1629 = vrsqrt.pop %v1568
    %v1630 = vmul.f32 %v1629, %v1568
    %v1631 = vmul.f32 %v1630, %v1629
    %v1632 = vmul.f32 0.5, %v1631
    %v1633 = vsub.f32 1.5, %v1632
    %v1634 = vmul.f32 %v1629, %v1633
    %vm1635 = vweird.f32 %v1568
    %vm1636 = vweird.f32 %v1629
    %vm1637 = vmor %vm1635, %vm1636
    %v1638 = vsel %vm1637, %v1629, %v1634
    %v1639 = vrsqrt.pop %v1569
    %v1640 = vmul.f32 %v1639, %v1569
    %v1641 = vmul.f32 %v1640, %v1639
    %v1642 = vmul.f32 0.5, %v1641
    %v1643 = vsub.f32 1.5, %v1642
    %v1644 = vmul.f32 %v1639, %v1643
    %vm1645 = vweird.f32 %v1569
    %vm1646 = vweird.f32 %v1639
    %vm1647 = vmor %vm1645, %vm1646
    %v1648 = vsel %vm1647, %v1639, %v1644
    %v1649 = vrsqrt.pop %v1570
    %v1650 = vmul.f32 %v1649, %v1570
    %v1651 = vmul.f32 %v1650, %v1649
    %v1652 = vmul.f32 0.5, %v1651
    %v1653 = vsub.f32 1.5, %v1652
    %v1654 = vmul.f32 %v1649, %v1653
    %vm1655 = vweird.f32 %v1570
    %vm1656 = vweird.f32 %v1649
    %vm1657 = vmor %vm1655, %vm1656
    %v1658 = vsel %vm1657, %v1649, %v1654
    %v1659 = vrsqrt.pop %v1571
    %v1660 = vmul.f32 %v1659, %v1571
    %v1661 = vmul.f32 %v1660, %v1659
    %v1662 = vmul.f32 0.5, %v1661
    %v1663 = vsub.f32 1.5, %v1662
    %v1664 = vmul.f32 %v1659, %v1663
    %vm1665 = vweird.f32 %v1571
    %vm1666 = vweird.f32 %v1659
    %vm1667 = vmor %vm1665, %vm1666
    %v1668 = vsel %vm1667, %v1659, %v1664
    %v1669 = vrsqrt.pop %v1572
    %v1670 = vmul.f32 %v1669, %v1572
    %v1671 = vmul.f32 %v1670, %v1669
    %v1672 = vmul.f32 0.5, %v1671
    %v1673 = vsub.f32 1.5, %v1672
    %v1674 = vmul.f32 %v1669, %v1673
    %vm1675 = vweird.f32 %v1572
    %vm1676 = vweird.f32 %v1669
    %vm1677 = vmor %vm1675, %vm1676
    %v1678 = vsel %vm1677, %v1669, %v1674
    %v1679 = vrsqrt.pop %v1573
    %v1680 = vmul.f32 %v1679, %v1573
    %v1681 = vmul.f32 %v1680, %v1679
    %v1682 = vmul.f32 0.5, %v1681
    %v1683 = vsub.f32 1.5, %v1682
    %v1684 = vmul.f32 %v1679, %v1683
    %vm1685 = vweird.f32 %v1573
    %vm1686 = vweird.f32 %v1679
    %vm1687 = vmor %vm1685, %vm1686
    %v1688 = vsel %vm1687, %v1679, %v1684
    %v1689 = vrsqrt.pop %v1574
    %v1690 = vmul.f32 %v1689, %v1574
    %v1691 = vmul.f32 %v1690, %v1689
    %v1692 = vmul.f32 0.5, %v1691
    %v1693 = vsub.f32 1.5, %v1692
    %v1694 = vmul.f32 %v1689, %v1693
    %vm1695 = vweird.f32 %v1574
    %vm1696 = vweird.f32 %v1689
    %vm1697 = vmor %vm1695, %vm1696
    %v1698 = vsel %vm1697, %v1689, %v1694
    %v1699 = vrsqrt.pop %v1575
    %v1700 = vmul.f32 %v1699, %v1575
    %v1701 = vmul.f32 %v1700, %v1699
    %v1702 = vmul.f32 0.5, %v1701
    %v1703 = vsub.f32 1.5, %v1702
    %v1704 = vmul.f32 %v1699, %v1703
    %vm1705 = vweird.f32 %v1575
    %vm1706 = vweird.f32 %v1699
    %vm1707 = vmor %vm1705, %vm1706
    %v1708 = vsel %vm1707, %v1699, %v1704
    %v1709 = vrsqrt.pop %v1576
    %v1710 = vmul.f32 %v1709, %v1576
    %v1711 = vmul.f32 %v1710, %v1709
    %v1712 = vmul.f32 0.5, %v1711
    %v1713 = vsub.f32 1.5, %v1712
    %v1714 = vmul.f32 %v1709, %v1713
    %vm1715 = vweird.f32 %v1576
    %vm1716 = vweird.f32 %v1709
    %vm1717 = vmor %vm1715, %vm1716
    %v1718 = vsel %vm1717, %v1709, %v1714
    %v1719 = vrsqrt.pop %v1577
    %v1720 = vmul.f32 %v1719, %v1577
    %v1721 = vmul.f32 %v1720, %v1719
    %v1722 = vmul.f32 0.5, %v1721
    %v1723 = vsub.f32 1.5, %v1722
    %v1724 = vmul.f32 %v1719, %v1723
    %vm1725 = vweird.f32 %v1577
    %vm1726 = vweird.f32 %v1719
    %vm1727 = vmor %vm1725, %vm1726
    %v1728 = vsel %vm1727, %v1719, %v1724
    %v1729 = vrsqrt.pop %v1578
    %v1730 = vmul.f32 %v1729, %v1578
    %v1731 = vmul.f32 %v1730, %v1729
    %v1732 = vmul.f32 0.5, %v1731
    %v1733 = vsub.f32 1.5, %v1732
    %v1734 = vmul.f32 %v1729, %v1733
    %vm1735 = vweird.f32 %v1578
    %vm1736 = vweird.f32 %v1729
    %vm1737 = vmor %vm1735, %vm1736
    %v1738 = vsel %vm1737, %v1729, %v1734
    %v1739 = vmul.f32 %v1547, %v1588
    %v1740 = vmul.f32 %v1548, %v1598
    %v1741 = vmul.f32 %v1549, %v1608
    %v1742 = vmul.f32 %v1550, %v1618
    %v1743 = vmul.f32 %v1551, %v1628
    %v1744 = vmul.f32 %v1552, %v1638
    %v1745 = vmul.f32 %v1553, %v1648
    %v1746 = vmul.f32 %v1554, %v1658
    %v1747 = vmul.f32 %v1555, %v1668
    %v1748 = vmul.f32 %v1556, %v1678
    %v1749 = vmul.f32 %v1557, %v1688
    %v1750 = vmul.f32 %v1558, %v1698
    %v1751 = vmul.f32 %v1559, %v1708
    %v1752 = vmul.f32 %v1560, %v1718
    %v1753 = vmul.f32 %v1561, %v1728
    %v1754 = vmul.f32 %v1562, %v1738
    %v1755 = vperm.slane %v188, 5
    %v1756 = vmul.f32 %v1739, %v1755
    %v1757 = vmul.f32 %v1740, %v1755
    %v1758 = vmul.f32 %v1741, %v1755
    %v1759 = vmul.f32 %v1742, %v1755
    %v1760 = vmul.f32 %v1743, %v1755
    %v1761 = vmul.f32 %v1744, %v1755
    %v1762 = vmul.f32 %v1745, %v1755
    %v1763 = vmul.f32 %v1746, %v1755
    %v1764 = vmul.f32 %v1747, %v1755
    %v1765 = vmul.f32 %v1748, %v1755
    %v1766 = vmul.f32 %v1749, %v1755
    %v1767 = vmul.f32 %v1750, %v1755
    %v1768 = vmul.f32 %v1751, %v1755
    %v1769 = vmul.f32 %v1752, %v1755
    %v1770 = vmul.f32 %v1753, %v1755
    %v1771 = vmul.f32 %v1754, %v1755
    %v1772 = vperm.slane %v188, 6
    %v1773 = vadd.f32 %v1756, %v1772
    %v1774 = vadd.f32 %v1757, %v1772
    %v1775 = vadd.f32 %v1758, %v1772
    %v1776 = vadd.f32 %v1759, %v1772
    %v1777 = vadd.f32 %v1760, %v1772
    %v1778 = vadd.f32 %v1761, %v1772
    %v1779 = vadd.f32 %v1762, %v1772
    %v1780 = vadd.f32 %v1763, %v1772
    %v1781 = vadd.f32 %v1764, %v1772
    %v1782 = vadd.f32 %v1765, %v1772
    %v1783 = vadd.f32 %v1766, %v1772
    %v1784 = vadd.f32 %v1767, %v1772
    %v1785 = vadd.f32 %v1768, %v1772
    %v1786 = vadd.f32 %v1769, %v1772
    %v1787 = vadd.f32 %v1770, %v1772
    %v1788 = vadd.f32 %v1771, %v1772
    %1789 = vst [vmem:[#allocation16] sm:$0xff] %v1773
    %1790 = vst [vmem:[#allocation16 + $0x8] sm:$0xff] %v1774
    %1791 = vst [vmem:[#allocation16 + $0x10] sm:$0xff] %v1775
    %1792 = vst [vmem:[#allocation16 + $0x18] sm:$0xff] %v1776
    %1793 = vst [vmem:[#allocation16 + $0x20] sm:$0xff] %v1777
    %1794 = vst [vmem:[#allocation16 + $0x28] sm:$0xff] %v1778
    %1795 = vst [vmem:[#allocation16 + $0x30] sm:$0xff] %v1779
    %1796 = vst [vmem:[#allocation16 + $0x38] sm:$0xff] %v1780
    %1797 = vst [vmem:[#allocation16 + $0x40] sm:$0xff] %v1781
    %1798 = vst [vmem:[#allocation16 + $0x48] sm:$0xff] %v1782
    %1799 = vst [vmem:[#allocation16 + $0x50] sm:$0xff] %v1783
    %1800 = vst [vmem:[#allocation16 + $0x58] sm:$0xff] %v1784
    %1801 = vst [vmem:[#allocation16 + $0x60] sm:$0xff] %v1785
    %1802 = vst [vmem:[#allocation16 + $0x68] sm:$0xff] %v1786
    %1803 = vst [vmem:[#allocation16 + $0x70] sm:$0xff] %v1787
    %1804 = vst [vmem:[#allocation16 + $0x78] sm:$0xff] %v1788
    // Predicated region
    $region66: #{tpu_custom_call.1} parent=1 // pred_check
      _
    $region67: #{tpu_custom_call.1} parent=1 // pred_check_branch
      %1806 = sbr.rel (0) target = $region69
    $region68: #{tpu_custom_call.1} parent=1 // pred_region
      %1808 = vsyncadd [#allocation4], 0
      %s1809 = sshll.u32 [#allocation16], 4
      %s1810 = int_to_ptr.vmem [resolvable:$true] %s1809
      %s1811 = sshll.u32 %s8, 4
      %s1812 = int_to_ptr.hbm [resolvable:$true] %s1811
      %1817 = dma.vmem_to_hbm [thread:$0]  %s1810, 2048, %s1812, [#allocation4], 128, 128, 8
    $region69: #{tpu_custom_call.1} parent=1 // pred_fallthru
      _
    // Predicated region
    $region70: #{tpu_custom_call.1} parent=1 // pred_check
      _
    $region71: #{tpu_custom_call.1} parent=1 // pred_check_branch
      %1819 = sbr.rel (0) target = $region73
    $region72: #{tpu_custom_call.1} parent=1 // pred_region
      %1821 = dma.done [#allocation4], 2048
    $region73: #{tpu_custom_call.1} parent=1 // pred_fallthru
      _
    %1822 = vsyncpa [#allocation3], 1
    %1823 = vsyncpa [#allocation6], 1
    %1824 = vsyncpa [#allocation9], 1
    %1825 = vsyncpa [#allocation12], 1
    %1826 = vsyncpa [#allocation15], 1
    %1827 = vsyncpa [#allocation4], 1

</llo_original>
